<compile_context>
chip_gen: v6e
topology: v6e:2x2x1
jax: 0.10.0
libtpu: 0.0.40
codegen_flags: <defaults>
</compile_context>

<pallas_src>
import functools

import jax
import jax.numpy as jnp
from jax.experimental import pallas as pl
from jax.experimental.pallas import tpu as pltpu


# ---------------------------------------------------------------------------
# Kernel
# ---------------------------------------------------------------------------
def _iaff_kernel(x_ref, r_ref, pool_ref, expand_ref,
                 w1l_ref, b1l_ref, w2l_ref, b2_ref,
                 w1g_ref, b1g_ref, w2g_ref,
                 o_ref):
    """Whole-problem, single-invocation kernel.

    x_ref, r_ref, o_ref : (C, B*S)  f32   lane axis = B*S (multiple of 128)
    pool_ref            : (B*S, B)  cdt   block-diag 1/S (per-batch mean)
    expand_ref          : (B, B*S)  cdt   block-diag 1   (per-batch broadcast)
    w1l_ref             : (2, Ci, C) cdt  local conv #1 weights, per round
    b1l_ref             : (2, Ci, 1) f32
    w2l_ref             : (2, C, Ci) cdt  local conv #2 weights, per round
    b2_ref              : (2, C, 1)  f32  local#2 + global#2 biases, pre-summed
    w1g_ref             : (Ci, C)    cdt  global conv #1 (shared across rounds)
    b1g_ref             : (Ci, 1)    f32
    w2g_ref             : (C, Ci)    cdt  global conv #2 (shared across rounds)
    cdt = dot-operand dtype (f32 exact, bf16 fast on v6e/v7x); accumulate f32.
    """
    cdt = w1l_ref.dtype
    f32 = jnp.float32

    x = x_ref[...]
    r = r_ref[...]
    d = x - r                          # hoisted once, reused by both rounds
    pool = pool_ref[...]
    expand = expand_ref[...]
    w1g = w1g_ref[...]
    b1g = b1g_ref[...]
    w2g = w2g_ref[...]

    def gate(a, rnd):
        """sigmoid(local_att(a) + global_att(a)), a: (C, B*S)."""
        a_c = a.astype(cdt)
        # ---- local branch: two 1x1 convs over all B*S positions -------------
        h_l = jnp.maximum(
            jnp.dot(w1l_ref[rnd], a_c, preferred_element_type=f32)
            + b1l_ref[rnd], 0.0)                                    # (Ci, B*S)
        pre = (jnp.dot(w2l_ref[rnd], h_l.astype(cdt),
                       preferred_element_type=f32)
               + b2_ref[rnd])                                       # (C, B*S)
        # ---- global branch: pool FIRST (== AdaptiveAvgPool2d(1)), then convs
        a_pool = jnp.dot(a_c, pool, preferred_element_type=f32)     # (C, B)
        h_g = jnp.maximum(
            jnp.dot(w1g, a_pool.astype(cdt), preferred_element_type=f32)
            + b1g, 0.0)                                             # (Ci, B)
        g = jnp.dot(w2g, h_g.astype(cdt), preferred_element_type=f32)   # (C, B)
        # broadcast the per-batch global logits across the spatial lanes (MXU)
        pre = pre + jnp.dot(g.astype(cdt), expand, preferred_element_type=f32)
        return 1.0 / (1.0 + jnp.exp(-pre))                          # sigmoid

    # Round 1
    wei = gate(x + r, 0)
    xi = r + wei * d
    # Round 2 (PyTorch reuses global_att, NOT global_att2)
    wei2 = gate(xi, 1)
    o_ref[...] = (r + wei2 * d).astype(o_ref.dtype)


# ---------------------------------------------------------------------------
# Wrapper
# ---------------------------------------------------------------------------
def iaff_forward(x_nchw, res_nchw, packed_params, *, compute_dtype=jnp.float32):
    """x, residual: (B, C, H, W) float32.  Returns (B, C, H, W) float32."""
    B, C, H, W = x_nchw.shape
    S = H * W
    BS = B * S

    # NOTE: the PyTorch batch-size-1 duplication is a no-op with eval-mode
    # (folded) BatchNorm, so it is intentionally dropped here.

    # Lane-dense layout: (B, C, H, W) -> (C, B*S).  One-off XLA relayout; every
    # kernel matmul / store then has a multiple-of-128 lane axis.
    x = jnp.transpose(x_nchw.reshape(B, C, S), (1, 0, 2)).reshape(C, BS)
    r = jnp.transpose(res_nchw.reshape(B, C, S), (1, 0, 2)).reshape(C, BS)

    w1l, b1l, w2l, b2, w1g, b1g, w2g = packed_params
    cdt = compute_dtype

    # Per-batch mean / broadcast as tiny block-diagonal matmuls (keeps the
    # segmented pooling on the MXU instead of a lane-splitting reshape).
    seg = jnp.repeat(jnp.eye(B, dtype=jnp.float32), S, axis=0)       # (BS, B)
    pool = (seg / S).astype(cdt)
    expand = seg.T.astype(cdt)

    vmem = pl.BlockSpec(memory_space=pltpu.MemorySpace.VMEM)

    out = pl.pallas_call(
        _iaff_kernel,
        out_shape=jax.ShapeDtypeStruct((C, BS), jnp.float32),
        in_specs=[vmem] * 11,
        out_specs=vmem,
    )(x, r, pool, expand,
      w1l.astype(cdt), b1l, w2l.astype(cdt), b2,
      w1g.astype(cdt), b1g, w2g.astype(cdt))

    return jnp.transpose(out.reshape(C, B, S), (1, 0, 2)).reshape(B, C, H, W)


# ---------------------------------------------------------------------------
# Deterministic parameter construction (conv + eval-BN -> folded W, b) + packing
# ---------------------------------------------------------------------------
def _conv_bn_folded(key, cin, cout, eps=1e-5):
    kw, kb, kg, kbt, km, kv = jax.random.split(key, 6)
    w = jax.random.normal(kw, (cout, cin), jnp.float32) * 0.1
    b = jax.random.normal(kb, (cout,), jnp.float32) * 0.1
    gamma = 1.0 + 0.1 * jax.random.normal(kg, (cout,), jnp.float32)
    beta = 0.1 * jax.random.normal(kbt, (cout,), jnp.float32)
    mean = 0.1 * jax.random.normal(km, (cout,), jnp.float32)
    var = jax.random.uniform(kv, (cout,), jnp.float32, minval=0.5, maxval=1.5)
    scale = gamma / jnp.sqrt(var + eps)
    return w * scale[:, None], (b - mean) * scale + beta


def _make_branch(key, channels, inter_channels):
    k1, k2 = jax.random.split(key)
    w1, b1 = _conv_bn_folded(k1, channels, inter_channels)
    w2, b2 = _conv_bn_folded(k2, inter_channels, channels)
    return w1, b1, w2, b2


def pack_iaff_params(local, glob, local2):
    """3 branches (global_att reused in round 2) -> 7 kernel arrays."""
    w1l1, b1l1, w2l1, b2l1 = local
    w1g, b1g, w2g, b2g = glob
    w1l2, b1l2, w2l2, b2l2 = local2
    w1l = jnp.stack([w1l1, w1l2])                                    # (2, Ci, C)
    b1l = jnp.stack([b1l1[:, None], b1l2[:, None]])                  # (2, Ci, 1)
    w2l = jnp.stack([w2l1, w2l2])                                    # (2, C, Ci)
    b2 = jnp.stack([(b2l1 + b2g)[:, None], (b2l2 + b2g)[:, None]])   # (2, C, 1)
    return w1l, b1l, w2l, b2, w1g, b1g[:, None], w2g


def make_iaff_params(key, channels=64, r=4):
    inter = channels // r
    kl, kg, kl2, _kg2 = jax.random.split(key, 4)   # global_att2 exists but unused
    local = _make_branch(kl, channels, inter)
    glob = _make_branch(kg, channels, inter)
    local2 = _make_branch(kl2, channels, inter)
    raw = (*local, *glob, *local2)
    packed = pack_iaff_params(local, glob, local2)
    return raw, packed


# ---------------------------------------------------------------------------
# Pure-JAX reference (unfused; true-f32 matmuls so the check is meaningful)
# ---------------------------------------------------------------------------
def iaff_reference(x_nchw, res_nchw, raw_params):
    (w1l, b1l, w2l, b2l,
     w1g, b1g, w2g, b2g,
     w1l2, b1l2, w2l2, b2l2) = raw_params
    B, C, H, W = x_nchw.shape
    S = H * W
    x = jnp.transpose(x_nchw.reshape(B, C, S), (0, 2, 1))   # (B, S, C)
    r = jnp.transpose(res_nchw.reshape(B, C, S), (0, 2, 1))

    hi = jax.lax.Precision.HIGHEST
    mm = lambda a, b: jnp.matmul(a, b, precision=hi)

    def local_branch(a, w1, b1, w2, b2):
        h = jnp.maximum(mm(a, w1.T) + b1, 0.0)
        return mm(h, w2.T) + b2

    def global_branch(a, w1, b1, w2, b2):
        p = jnp.mean(a, axis=1, keepdims=True)               # (B, 1, C)
        h = jnp.maximum(mm(p, w1.T) + b1, 0.0)
        return mm(h, w2.T) + b2

    xa = x + r
    wei = jax.nn.sigmoid(local_branch(xa, w1l, b1l, w2l, b2l)
                         + global_branch(xa, w1g, b1g, w2g, b2g))
    xi = x * wei + r * (1.0 - wei)
    wei2 = jax.nn.sigmoid(local_branch(xi, w1l2, b1l2, w2l2, b2l2)
                          + global_branch(xi, w1g, b1g, w2g, b2g))
    xo = x * wei2 + r * (1.0 - wei2)
    return jnp.transpose(xo, (0, 2, 1)).reshape(B, C, H, W)


# ---------------------------------------------------------------------------
if __name__ == "__main__":
    key = jax.random.PRNGKey(0)
    k_x, k_r, k_p = jax.random.split(key, 3)

    B, C, H, W = 2, 64, 8, 8          # channels=64, r=4 (module defaults); B*S=128
    x = jax.random.normal(k_x, (B, C, H, W), jnp.float32)
    residual = jax.random.normal(k_r, (B, C, H, W), jnp.float32)
    raw_params, packed_params = make_iaff_params(k_p, channels=C, r=4)

    ref = jax.block_until_ready(iaff_reference(x, residual, raw_params))

    # f32 dot-operand path (tolerance kept modest so the check is robust to
    # XLA/Mosaic matmul-precision defaults; observed error is far smaller).
    fwd_f32 = jax.jit(functools.partial(iaff_forward, compute_dtype=jnp.float32))
    out = jax.block_until_ready(fwd_f32(x, residual, packed_params))
    assert out.shape == (B, C, H, W)
    assert jnp.allclose(out, ref, rtol=2e-2, atol=2e-2), "f32 kernel != reference"

    # bf16 dot-operand path (v6e/v7x fast path): f32 accumulation, looser check
    # by construction (documented correctness concern from the review).
    fwd_bf16 = jax.jit(functools.partial(iaff_forward, compute_dtype=jnp.bfloat16))
    out_bf16 = jax.block_until_ready(fwd_bf16(x, residual, packed_params))
    assert out_bf16.shape == (B, C, H, W)
    assert jnp.allclose(out_bf16, ref, rtol=0.0, atol=0.3), "bf16 kernel far off"

    print("KERNEL_OK")
</pallas_src>

<mosaic_0001>
module attributes {stable_mosaic.version = 11 : i64} {
  func.func @_iaff_kernel(%arg0: memref<64x128xf32, #tpu.memory_space<vmem>>, %arg1: memref<64x128xf32, #tpu.memory_space<vmem>>, %arg2: memref<128x2xf32, #tpu.memory_space<vmem>>, %arg3: memref<2x128xf32, #tpu.memory_space<vmem>>, %arg4: memref<2x16x64xf32, #tpu.memory_space<vmem>>, %arg5: memref<2x16x1xf32, #tpu.memory_space<vmem>>, %arg6: memref<2x64x16xf32, #tpu.memory_space<vmem>>, %arg7: memref<2x64x1xf32, #tpu.memory_space<vmem>>, %arg8: memref<16x64xf32, #tpu.memory_space<vmem>>, %arg9: memref<16x1xf32, #tpu.memory_space<vmem>>, %arg10: memref<64x16xf32, #tpu.memory_space<vmem>>, %arg11: memref<64x128xf32, #tpu.memory_space<vmem>>) attributes {dimension_semantics = [], scalar_prefetch = 0 : i64, scratch_operands = 0 : i64, tpu.core_type = #tpu.core_type<tc>} {
    %c0 = arith.constant 0 : index
    %c0_0 = arith.constant 0 : index
    %0 = vector.load %arg0[%c0, %c0_0] : memref<64x128xf32, #tpu.memory_space<vmem>>, vector<64x128xf32>
    %c0_1 = arith.constant 0 : index
    %c0_2 = arith.constant 0 : index
    %1 = vector.load %arg1[%c0_1, %c0_2] : memref<64x128xf32, #tpu.memory_space<vmem>>, vector<64x128xf32>
    %2 = arith.subf %0, %1 : vector<64x128xf32>
    %c0_3 = arith.constant 0 : index
    %c0_4 = arith.constant 0 : index
    %3 = vector.load %arg2[%c0_3, %c0_4] : memref<128x2xf32, #tpu.memory_space<vmem>>, vector<128x2xf32>
    %c0_5 = arith.constant 0 : index
    %c0_6 = arith.constant 0 : index
    %4 = vector.load %arg3[%c0_5, %c0_6] : memref<2x128xf32, #tpu.memory_space<vmem>>, vector<2x128xf32>
    %c0_7 = arith.constant 0 : index
    %c0_8 = arith.constant 0 : index
    %5 = vector.load %arg8[%c0_7, %c0_8] : memref<16x64xf32, #tpu.memory_space<vmem>>, vector<16x64xf32>
    %c0_9 = arith.constant 0 : index
    %c0_10 = arith.constant 0 : index
    %6 = vector.load %arg9[%c0_9, %c0_10] : memref<16x1xf32, #tpu.memory_space<vmem>>, vector<16x1xf32>
    %c0_11 = arith.constant 0 : index
    %c0_12 = arith.constant 0 : index
    %7 = vector.load %arg10[%c0_11, %c0_12] : memref<64x16xf32, #tpu.memory_space<vmem>>, vector<64x16xf32>
    %8 = arith.addf %0, %1 : vector<64x128xf32>
    %c0_13 = arith.constant 0 : index
    %c0_14 = arith.constant 0 : index
    %c0_15 = arith.constant 0 : index
    %9 = vector.load %arg4[%c0_13, %c0_14, %c0_15] : memref<2x16x64xf32, #tpu.memory_space<vmem>>, vector<1x16x64xf32>
    %10 = vector.shape_cast %9 : vector<1x16x64xf32> to vector<16x64xf32>
    %cst = arith.constant dense<0.000000e+00> : vector<16x128xf32>
    %11 = tpu.matmul %10, %8, %cst {dimension_numbers = #tpu.dot_dimension_numbers<[1], [0], [0], [1], [0, 0, 1, 1], [], []>} : vector<16x64xf32>, vector<64x128xf32>, vector<16x128xf32> -> vector<16x128xf32>
    %c0_16 = arith.constant 0 : index
    %c0_17 = arith.constant 0 : index
    %c0_18 = arith.constant 0 : index
    %12 = vector.load %arg5[%c0_16, %c0_17, %c0_18] : memref<2x16x1xf32, #tpu.memory_space<vmem>>, vector<1x16x1xf32>
    %13 = vector.shape_cast %12 : vector<1x16x1xf32> to vector<16x1xf32>
    %14 = vector.broadcast %13 : vector<16x1xf32> to vector<16x128xf32>
    %15 = arith.addf %11, %14 : vector<16x128xf32>
    %cst_19 = arith.constant 0.000000e+00 : f32
    %16 = vector.broadcast %cst_19 : f32 to vector<16x128xf32>
    %17 = arith.maximumf %15, %16 : vector<16x128xf32>
    %c0_20 = arith.constant 0 : index
    %c0_21 = arith.constant 0 : index
    %c0_22 = arith.constant 0 : index
    %18 = vector.load %arg6[%c0_20, %c0_21, %c0_22] : memref<2x64x16xf32, #tpu.memory_space<vmem>>, vector<1x64x16xf32>
    %19 = vector.shape_cast %18 : vector<1x64x16xf32> to vector<64x16xf32>
    %cst_23 = arith.constant dense<0.000000e+00> : vector<64x128xf32>
    %20 = tpu.matmul %19, %17, %cst_23 {dimension_numbers = #tpu.dot_dimension_numbers<[1], [0], [0], [1], [0, 0, 1, 1], [], []>} : vector<64x16xf32>, vector<16x128xf32>, vector<64x128xf32> -> vector<64x128xf32>
    %c0_24 = arith.constant 0 : index
    %c0_25 = arith.constant 0 : index
    %c0_26 = arith.constant 0 : index
    %21 = vector.load %arg7[%c0_24, %c0_25, %c0_26] : memref<2x64x1xf32, #tpu.memory_space<vmem>>, vector<1x64x1xf32>
    %22 = vector.shape_cast %21 : vector<1x64x1xf32> to vector<64x1xf32>
    %23 = vector.broadcast %22 : vector<64x1xf32> to vector<64x128xf32>
    %24 = arith.addf %20, %23 : vector<64x128xf32>
    %cst_27 = arith.constant dense<0.000000e+00> : vector<64x2xf32>
    %25 = tpu.matmul %8, %3, %cst_27 {dimension_numbers = #tpu.dot_dimension_numbers<[1], [0], [0], [1], [0, 0, 1, 1], [], []>} : vector<64x128xf32>, vector<128x2xf32>, vector<64x2xf32> -> vector<64x2xf32>
    %cst_28 = arith.constant dense<0.000000e+00> : vector<16x2xf32>
    %26 = tpu.matmul %5, %25, %cst_28 {dimension_numbers = #tpu.dot_dimension_numbers<[1], [0], [0], [1], [0, 0, 1, 1], [], []>} : vector<16x64xf32>, vector<64x2xf32>, vector<16x2xf32> -> vector<16x2xf32>
    %27 = vector.broadcast %6 : vector<16x1xf32> to vector<16x2xf32>
    %28 = arith.addf %26, %27 : vector<16x2xf32>
    %cst_29 = arith.constant 0.000000e+00 : f32
    %29 = vector.broadcast %cst_29 : f32 to vector<16x2xf32>
    %30 = arith.maximumf %28, %29 : vector<16x2xf32>
    %cst_30 = arith.constant dense<0.000000e+00> : vector<64x2xf32>
    %31 = tpu.matmul %7, %30, %cst_30 {dimension_numbers = #tpu.dot_dimension_numbers<[1], [0], [0], [1], [0, 0, 1, 1], [], []>} : vector<64x16xf32>, vector<16x2xf32>, vector<64x2xf32> -> vector<64x2xf32>
    %cst_31 = arith.constant dense<0.000000e+00> : vector<64x128xf32>
    %32 = tpu.matmul %31, %4, %cst_31 {dimension_numbers = #tpu.dot_dimension_numbers<[1], [0], [0], [1], [0, 0, 1, 1], [], []>} : vector<64x2xf32>, vector<2x128xf32>, vector<64x128xf32> -> vector<64x128xf32>
    %33 = arith.addf %24, %32 : vector<64x128xf32>
    %cst_32 = arith.constant 0.000000e+00 : f32
    %34 = vector.broadcast %cst_32 : f32 to vector<64x128xf32>
    %35 = arith.subf %34, %33 : vector<64x128xf32>
    %36 = math.exp %35 : vector<64x128xf32>
    %cst_33 = arith.constant 1.000000e+00 : f32
    %37 = vector.broadcast %cst_33 : f32 to vector<64x128xf32>
    %38 = arith.addf %37, %36 : vector<64x128xf32>
    %cst_34 = arith.constant 1.000000e+00 : f32
    %39 = vector.broadcast %cst_34 : f32 to vector<64x128xf32>
    %40 = arith.divf %39, %38 : vector<64x128xf32>
    %41 = arith.mulf %40, %2 : vector<64x128xf32>
    %42 = arith.addf %1, %41 : vector<64x128xf32>
    %c1 = arith.constant 1 : index
    %c0_35 = arith.constant 0 : index
    %c0_36 = arith.constant 0 : index
    %43 = vector.load %arg4[%c1, %c0_35, %c0_36] : memref<2x16x64xf32, #tpu.memory_space<vmem>>, vector<1x16x64xf32>
    %44 = vector.shape_cast %43 : vector<1x16x64xf32> to vector<16x64xf32>
    %cst_37 = arith.constant dense<0.000000e+00> : vector<16x128xf32>
    %45 = tpu.matmul %44, %42, %cst_37 {dimension_numbers = #tpu.dot_dimension_numbers<[1], [0], [0], [1], [0, 0, 1, 1], [], []>} : vector<16x64xf32>, vector<64x128xf32>, vector<16x128xf32> -> vector<16x128xf32>
    %c1_38 = arith.constant 1 : index
    %c0_39 = arith.constant 0 : index
    %c0_40 = arith.constant 0 : index
    %46 = vector.load %arg5[%c1_38, %c0_39, %c0_40] : memref<2x16x1xf32, #tpu.memory_space<vmem>>, vector<1x16x1xf32>
    %47 = vector.shape_cast %46 : vector<1x16x1xf32> to vector<16x1xf32>
    %48 = vector.broadcast %47 : vector<16x1xf32> to vector<16x128xf32>
    %49 = arith.addf %45, %48 : vector<16x128xf32>
    %cst_41 = arith.constant 0.000000e+00 : f32
    %50 = vector.broadcast %cst_41 : f32 to vector<16x128xf32>
    %51 = arith.maximumf %49, %50 : vector<16x128xf32>
    %c1_42 = arith.constant 1 : index
    %c0_43 = arith.constant 0 : index
    %c0_44 = arith.constant 0 : index
    %52 = vector.load %arg6[%c1_42, %c0_43, %c0_44] : memref<2x64x16xf32, #tpu.memory_space<vmem>>, vector<1x64x16xf32>
    %53 = vector.shape_cast %52 : vector<1x64x16xf32> to vector<64x16xf32>
    %cst_45 = arith.constant dense<0.000000e+00> : vector<64x128xf32>
    %54 = tpu.matmul %53, %51, %cst_45 {dimension_numbers = #tpu.dot_dimension_numbers<[1], [0], [0], [1], [0, 0, 1, 1], [], []>} : vector<64x16xf32>, vector<16x128xf32>, vector<64x128xf32> -> vector<64x128xf32>
    %c1_46 = arith.constant 1 : index
    %c0_47 = arith.constant 0 : index
    %c0_48 = arith.constant 0 : index
    %55 = vector.load %arg7[%c1_46, %c0_47, %c0_48] : memref<2x64x1xf32, #tpu.memory_space<vmem>>, vector<1x64x1xf32>
    %56 = vector.shape_cast %55 : vector<1x64x1xf32> to vector<64x1xf32>
    %57 = vector.broadcast %56 : vector<64x1xf32> to vector<64x128xf32>
    %58 = arith.addf %54, %57 : vector<64x128xf32>
    %cst_49 = arith.constant dense<0.000000e+00> : vector<64x2xf32>
    %59 = tpu.matmul %42, %3, %cst_49 {dimension_numbers = #tpu.dot_dimension_numbers<[1], [0], [0], [1], [0, 0, 1, 1], [], []>} : vector<64x128xf32>, vector<128x2xf32>, vector<64x2xf32> -> vector<64x2xf32>
    %cst_50 = arith.constant dense<0.000000e+00> : vector<16x2xf32>
    %60 = tpu.matmul %5, %59, %cst_50 {dimension_numbers = #tpu.dot_dimension_numbers<[1], [0], [0], [1], [0, 0, 1, 1], [], []>} : vector<16x64xf32>, vector<64x2xf32>, vector<16x2xf32> -> vector<16x2xf32>
    %61 = vector.broadcast %6 : vector<16x1xf32> to vector<16x2xf32>
    %62 = arith.addf %60, %61 : vector<16x2xf32>
    %cst_51 = arith.constant 0.000000e+00 : f32
    %63 = vector.broadcast %cst_51 : f32 to vector<16x2xf32>
    %64 = arith.maximumf %62, %63 : vector<16x2xf32>
    %cst_52 = arith.constant dense<0.000000e+00> : vector<64x2xf32>
    %65 = tpu.matmul %7, %64, %cst_52 {dimension_numbers = #tpu.dot_dimension_numbers<[1], [0], [0], [1], [0, 0, 1, 1], [], []>} : vector<64x16xf32>, vector<16x2xf32>, vector<64x2xf32> -> vector<64x2xf32>
    %cst_53 = arith.constant dense<0.000000e+00> : vector<64x128xf32>
    %66 = tpu.matmul %65, %4, %cst_53 {dimension_numbers = #tpu.dot_dimension_numbers<[1], [0], [0], [1], [0, 0, 1, 1], [], []>} : vector<64x2xf32>, vector<2x128xf32>, vector<64x128xf32> -> vector<64x128xf32>
    %67 = arith.addf %58, %66 : vector<64x128xf32>
    %cst_54 = arith.constant 0.000000e+00 : f32
    %68 = vector.broadcast %cst_54 : f32 to vector<64x128xf32>
    %69 = arith.subf %68, %67 : vector<64x128xf32>
    %70 = math.exp %69 : vector<64x128xf32>
    %cst_55 = arith.constant 1.000000e+00 : f32
    %71 = vector.broadcast %cst_55 : f32 to vector<64x128xf32>
    %72 = arith.addf %71, %70 : vector<64x128xf32>
    %cst_56 = arith.constant 1.000000e+00 : f32
    %73 = vector.broadcast %cst_56 : f32 to vector<64x128xf32>
    %74 = arith.divf %73, %72 : vector<64x128xf32>
    %75 = arith.mulf %74, %2 : vector<64x128xf32>
    %76 = arith.addf %1, %75 : vector<64x128xf32>
    %c0_57 = arith.constant 0 : index
    %c0_58 = arith.constant 0 : index
    %77 = vector.load %arg11[%c0_57, %c0_58] : memref<64x128xf32, #tpu.memory_space<vmem>>, vector<64x128xf32>
    tpu.vector_store %arg11[%c0_57, %c0_58], %76 {strides = array<i32>} : memref<64x128xf32, #tpu.memory_space<vmem>>, vector<64x128xf32>,
    return
  }
}

</mosaic_0001>

<llo_original>
// kernel: iaff_forward.1
$region0: #{iaff_forward.1}
  #allocation0 [shape = 'u32[]', space=smem, size = 0x4, offset = 0x4, fixed_abs, tag = 'smem constant byte address 0x4 - core index']
  #allocation1 [shape = 'u32[144,128]{1,0:T(1,128)}', space=vmem, size = 0x12000, scoped, tag = 'internal scratch']
  %s0 = inlined_call_operand.vmem [shape: f32[64,128], index: 0, kind: input, shape index: {}]
  %s1 = inlined_call_operand.vmem [shape: f32[64,128], index: 1, kind: input, shape index: {}]
  %s2 = inlined_call_operand.vmem [shape: f32[128,2], index: 2, kind: input, shape index: {}]
  %s3 = inlined_call_operand.vmem [shape: f32[2,128], index: 3, kind: input, shape index: {}]
  %s4 = inlined_call_operand.vmem [shape: f32[2,16,64], index: 4, kind: input, shape index: {}]
  %s5 = inlined_call_operand.vmem [shape: f32[2,16,1], index: 5, kind: input, shape index: {}]
  %s6 = inlined_call_operand.vmem [shape: f32[2,64,16], index: 6, kind: input, shape index: {}]
  %s7 = inlined_call_operand.vmem [shape: f32[2,64,1], index: 7, kind: input, shape index: {}]
  %s8 = inlined_call_operand.vmem [shape: f32[16,64], index: 8, kind: input, shape index: {}]
  %s9 = inlined_call_operand.vmem [shape: f32[16,1], index: 9, kind: input, shape index: {}]
  %s10 = inlined_call_operand.vmem [shape: f32[64,16], index: 10, kind: input, shape index: {}]
  %s11 = inlined_call_operand.vmem [shape: f32[64,128], index: 11, kind: output, shape index: {}]
  %s12 = sld [smem:[#allocation0]]
  $region54: #{iaff_forward.1} parent=0
    _
  %s14 = ssub.s32 1, %s12
  %s15 = scalar_select 0, %s14, %s12
  // Predicated region
  $region2: #{iaff_forward.1} parent=0 // pred_check
    _
  $region3: #{iaff_forward.1} parent=0 // pred_check_branch
    %17 = sbr.rel (0) target = $region5
  $region4: #{iaff_forward.1} parent=0 // pred_region
    _
  $region5: #{iaff_forward.1} parent=0 // pred_fallthru
    _
  // Predicated region
  $region6: #{iaff_forward.1} parent=0 // pred_check
    _
  $region7: #{iaff_forward.1} parent=0 // pred_check_branch
    %19 = sbr.rel (0) target = $region9
  $region8: #{iaff_forward.1} parent=0 // pred_region
    _
  $region9: #{iaff_forward.1} parent=0 // pred_fallthru
    _
  // Predicated region
  $region10: #{iaff_forward.1} parent=0 // pred_check
    _
  $region11: #{iaff_forward.1} parent=0 // pred_check_branch
    %21 = sbr.rel (0) target = $region13
  $region12: #{iaff_forward.1} parent=0 // pred_region
    _
  $region13: #{iaff_forward.1} parent=0 // pred_fallthru
    _
  // Predicated region
  $region14: #{iaff_forward.1} parent=0 // pred_check
    _
  $region15: #{iaff_forward.1} parent=0 // pred_check_branch
    %23 = sbr.rel (0) target = $region17
  $region16: #{iaff_forward.1} parent=0 // pred_region
    _
  $region17: #{iaff_forward.1} parent=0 // pred_fallthru
    _
  // Predicated region
  $region18: #{iaff_forward.1} parent=0 // pred_check
    _
  $region19: #{iaff_forward.1} parent=0 // pred_check_branch
    %25 = sbr.rel (0) target = $region21
  $region20: #{iaff_forward.1} parent=0 // pred_region
    _
  $region21: #{iaff_forward.1} parent=0 // pred_fallthru
    _
  // Predicated region
  $region22: #{iaff_forward.1} parent=0 // pred_check
    _
  $region23: #{iaff_forward.1} parent=0 // pred_check_branch
    %27 = sbr.rel (0) target = $region25
  $region24: #{iaff_forward.1} parent=0 // pred_region
    _
  $region25: #{iaff_forward.1} parent=0 // pred_fallthru
    _
  // Predicated region
  $region26: #{iaff_forward.1} parent=0 // pred_check
    _
  $region27: #{iaff_forward.1} parent=0 // pred_check_branch
    %29 = sbr.rel (0) target = $region29
  $region28: #{iaff_forward.1} parent=0 // pred_region
    _
  $region29: #{iaff_forward.1} parent=0 // pred_fallthru
    _
  // Predicated region
  $region30: #{iaff_forward.1} parent=0 // pred_check
    _
  $region31: #{iaff_forward.1} parent=0 // pred_check_branch
    %31 = sbr.rel (0) target = $region33
  $region32: #{iaff_forward.1} parent=0 // pred_region
    _
  $region33: #{iaff_forward.1} parent=0 // pred_fallthru
    _
  // Predicated region
  $region34: #{iaff_forward.1} parent=0 // pred_check
    _
  $region35: #{iaff_forward.1} parent=0 // pred_check_branch
    %33 = sbr.rel (0) target = $region37
  $region36: #{iaff_forward.1} parent=0 // pred_region
    _
  $region37: #{iaff_forward.1} parent=0 // pred_fallthru
    _
  // Predicated region
  $region38: #{iaff_forward.1} parent=0 // pred_check
    _
  $region39: #{iaff_forward.1} parent=0 // pred_check_branch
    %35 = sbr.rel (0) target = $region41
  $region40: #{iaff_forward.1} parent=0 // pred_region
    _
  $region41: #{iaff_forward.1} parent=0 // pred_fallthru
    _
  // Predicated region
  $region42: #{iaff_forward.1} parent=0 // pred_check
    _
  $region43: #{iaff_forward.1} parent=0 // pred_check_branch
    %37 = sbr.rel (0) target = $region45
  $region44: #{iaff_forward.1} parent=0 // pred_region
    _
  $region45: #{iaff_forward.1} parent=0 // pred_fallthru
    _
  %v38 = vld [vmem:[%s0] sm:$0xff]
  %v39 = vld [vmem:[%s0 + $0x8] sm:$0xff]
  %v40 = vld [vmem:[%s0 + $0x10] sm:$0xff]
  %v41 = vld [vmem:[%s0 + $0x18] sm:$0xff]
  %v42 = vld [vmem:[%s0 + $0x20] sm:$0xff]
  %v43 = vld [vmem:[%s0 + $0x28] sm:$0xff]
  %v44 = vld [vmem:[%s0 + $0x30] sm:$0xff]
  %v45 = vld [vmem:[%s0 + $0x38] sm:$0xff]
  %v46 = vld [vmem:[%s1] sm:$0xff]
  %v47 = vld [vmem:[%s1 + $0x8] sm:$0xff]
  %v48 = vld [vmem:[%s1 + $0x10] sm:$0xff]
  %v49 = vld [vmem:[%s1 + $0x18] sm:$0xff]
  %v50 = vld [vmem:[%s1 + $0x20] sm:$0xff]
  %v51 = vld [vmem:[%s1 + $0x28] sm:$0xff]
  %v52 = vld [vmem:[%s1 + $0x30] sm:$0xff]
  %v53 = vld [vmem:[%s1 + $0x38] sm:$0xff]
  %v54 = vsub.f32 %v38, %v46
  %v55 = vsub.f32 %v39, %v47
  %v56 = vsub.f32 %v40, %v48
  %v57 = vsub.f32 %v41, %v49
  %v58 = vsub.f32 %v42, %v50
  %v59 = vsub.f32 %v43, %v51
  %v60 = vsub.f32 %v44, %v52
  %v61 = vsub.f32 %v45, %v53
  %v62 = vld [vmem:[%s2] sm:$0xff]
  %v63 = vld [vmem:[%s2 + $0x8] sm:$0xff]
  %v64 = vld [vmem:[%s2 + $0x10] sm:$0xff]
  %v65 = vld [vmem:[%s2 + $0x18] sm:$0xff]
  %v66 = vld [vmem:[%s2 + $0x20] sm:$0xff]
  %v67 = vld [vmem:[%s2 + $0x28] sm:$0xff]
  %v68 = vld [vmem:[%s2 + $0x30] sm:$0xff]
  %v69 = vld [vmem:[%s2 + $0x38] sm:$0xff]
  %v70 = vld [vmem:[%s2 + $0x40] sm:$0xff]
  %v71 = vld [vmem:[%s2 + $0x48] sm:$0xff]
  %v72 = vld [vmem:[%s2 + $0x50] sm:$0xff]
  %v73 = vld [vmem:[%s2 + $0x58] sm:$0xff]
  %v74 = vld [vmem:[%s2 + $0x60] sm:$0xff]
  %v75 = vld [vmem:[%s2 + $0x68] sm:$0xff]
  %v76 = vld [vmem:[%s2 + $0x70] sm:$0xff]
  %v77 = vld [vmem:[%s2 + $0x78] sm:$0xff]
  %v78 = vld [vmem:[%s3] sm:$0x3]
  %v79 = vld [vmem:[%s8] sm:$0xff]
  %v80 = vld [vmem:[%s8 + $0x8] sm:$0xff]
  %v81 = vld [vmem:[%s9] sm:$0xff]
  %v82 = vld [vmem:[%s9 + $0x8] sm:$0xff]
  %v83 = vld [vmem:[%s10] sm:$0xff]
  %v84 = vld [vmem:[%s10 + $0x8] sm:$0xff]
  %v85 = vld [vmem:[%s10 + $0x10] sm:$0xff]
  %v86 = vld [vmem:[%s10 + $0x18] sm:$0xff]
  %v87 = vld [vmem:[%s10 + $0x20] sm:$0xff]
  %v88 = vld [vmem:[%s10 + $0x28] sm:$0xff]
  %v89 = vld [vmem:[%s10 + $0x30] sm:$0xff]
  %v90 = vld [vmem:[%s10 + $0x38] sm:$0xff]
  %v91 = vadd.f32 %v38, %v46
  %v92 = vadd.f32 %v39, %v47
  %v93 = vadd.f32 %v40, %v48
  %v94 = vadd.f32 %v41, %v49
  %v95 = vadd.f32 %v42, %v50
  %v96 = vadd.f32 %v43, %v51
  %v97 = vadd.f32 %v44, %v52
  %v98 = vadd.f32 %v45, %v53
  %v99 = vld [vmem:[%s4] sm:$0xff]
  %v100 = vld [vmem:[%s4 + $0x8] sm:$0xff]
  %v101 = vld [vmem:[%s5] sm:$0xff]
  %v102 = vld [vmem:[%s5 + $0x8] sm:$0xff]
  %104 = vset.pattern.permute.xlu0 0
  %105 = vperm.xlu0 %104, %v101
  %v106 = vpop.permute.xlu0 %105
  %109 = vset.pattern.permute.xlu0 0
  %110 = vperm.xlu0 %109, %v102
  %v111 = vpop.permute.xlu0 %110
  %vm113 = vcmask 523264
  %v115 = vsel %vm113, %v99, 0
  %v118 = vsel %vm113, %v100, 0
  %120 = vmatprep.subr.mxu0 0.0
  %121 = vmatpush1.msra.mxu0 0.0
  %122 = vmatprep.subr.mxu0 0.0
  %123 = vmatpush1.msra.mxu0 0.0
  %124 = vmatprep.subr.mxu0 0.0
  %125 = vmatpush1.msra.mxu0 0.0
  %126 = vmatprep.subr.mxu0 0.0
  %127 = vmatpush1.msra.mxu0 0.0
  %128 = vmatprep.subr.mxu0 0.0
  %129 = vmatpush1.msra.mxu0 0.0
  %130 = vmatprep.subr.mxu0 0.0
  %131 = vmatpush1.msra.mxu0 0.0
  %132 = vmatprep.subr.mxu0 0.0
  %133 = vmatpush1.msra.mxu0 0.0
  %134 = vmatprep.subr.mxu0 0.0
  %135 = vmatpush1.msra.mxu0 0.0
  %136 = vmatprep.subr.mxu0 0.0
  %137 = vmatpush1.msra.mxu0 %v98
  %138 = vmatprep.subr.mxu0 0.0
  %139 = vmatpush1.msra.mxu0 %v97
  %140 = vmatprep.subr.mxu0 0.0
  %141 = vmatpush1.msra.mxu0 %v96
  %142 = vmatprep.subr.mxu0 0.0
  %143 = vmatpush1.msra.mxu0 %v95
  %144 = vmatprep.subr.mxu0 0.0
  %145 = vmatpush1.msra.mxu0 %v94
  %146 = vmatprep.subr.mxu0 0.0
  %147 = vmatpush1.msra.mxu0 %v93
  %148 = vmatprep.subr.mxu0 0.0
  %149 = vmatpush1.msra.mxu0 %v92
  %150 = vmatprep.subr.mxu0 0.0
  %151 = vmatpush1.msra.mxu0 %v91
  %152 = vmatprep.subr.mxu0 0.0
  %153 = vmatpush2.msra.mxu0 0.0
  %154 = vmatprep.subr.mxu0 0.0
  %155 = vmatpush2.msra.mxu0 0.0
  %156 = vmatprep.subr.mxu0 0.0
  %157 = vmatpush2.msra.mxu0 0.0
  %158 = vmatprep.subr.mxu0 0.0
  %159 = vmatpush2.msra.mxu0 0.0
  %160 = vmatprep.subr.mxu0 0.0
  %161 = vmatpush2.msra.mxu0 0.0
  %162 = vmatprep.subr.mxu0 0.0
  %163 = vmatpush2.msra.mxu0 0.0
  %164 = vmatprep.subr.mxu0 0.0
  %165 = vmatpush2.msra.mxu0 0.0
  %166 = vmatprep.subr.mxu0 0.0
  %167 = vmatpush2.msra.mxu0 0.0
  %168 = vmatprep.subr.mxu0 0.0
  %169 = vmatpush2.msra.mxu0 0.0
  %170 = vmatprep.subr.mxu0 0.0
  %171 = vmatpush2.msra.mxu0 0.0
  %172 = vmatprep.subr.mxu0 0.0
  %173 = vmatpush2.msra.mxu0 0.0
  %174 = vmatprep.subr.mxu0 0.0
  %175 = vmatpush2.msra.mxu0 0.0
  %176 = vmatprep.subr.mxu0 0.0
  %177 = vmatpush2.msra.mxu0 0.0
  %178 = vmatprep.subr.mxu0 0.0
  %179 = vmatpush2.msra.mxu0 0.0
  %180 = vmatprep.subr.mxu0 0.0
  %181 = vmatpush2.msra.mxu0 0.0
  %182 = vmatprep.subr.mxu0 0.0
  %183 = vmatpush2.msra.mxu0 0.0
  %184 = vmatprep.mubr.f32.mxu0 0.0
  %185 = vmatmul.mubr.f32.gmra.mxu0 %v115
  %v186 = vpop.f32.mrf.mxu0
  %v187 = vadd.f32 %v106, %v186
  %v188 = vpop.f32.mrf.mxu0
  %189 = vmatprep.mubr.f32.mxu0 0.0
  %190 = vmatmul.mubr.f32.gmra.mxu0 %v118
  %v191 = vpop.f32.mrf.mxu0
  %v192 = vadd.f32 %v111, %v191
  %v193 = vpop.f32.mrf.mxu0
  %194 = vdwg.mxu0
  %v195 = vmax.f32 %v187, 0.0
  %v196 = vmax.f32 %v192, 0.0
  %v197 = vld [vmem:[%s6] sm:$0xff]
  %v198 = vld [vmem:[%s6 + $0x8] sm:$0xff]
  %v199 = vld [vmem:[%s6 + $0x10] sm:$0xff]
  %v200 = vld [vmem:[%s6 + $0x18] sm:$0xff]
  %v201 = vld [vmem:[%s6 + $0x20] sm:$0xff]
  %v202 = vld [vmem:[%s6 + $0x28] sm:$0xff]
  %v203 = vld [vmem:[%s6 + $0x30] sm:$0xff]
  %v204 = vld [vmem:[%s6 + $0x38] sm:$0xff]
  %v205 = vld [vmem:[%s7] sm:$0xff]
  %v206 = vld [vmem:[%s7 + $0x8] sm:$0xff]
  %v207 = vld [vmem:[%s7 + $0x10] sm:$0xff]
  %v208 = vld [vmem:[%s7 + $0x18] sm:$0xff]
  %v209 = vld [vmem:[%s7 + $0x20] sm:$0xff]
  %v210 = vld [vmem:[%s7 + $0x28] sm:$0xff]
  %v211 = vld [vmem:[%s7 + $0x30] sm:$0xff]
  %v212 = vld [vmem:[%s7 + $0x38] sm:$0xff]
  %214 = vset.pattern.permute.xlu0 0
  %215 = vperm.xlu0 %214, %v205
  %v216 = vpop.permute.xlu0 %215
  %219 = vset.pattern.permute.xlu0 0
  %220 = vperm.xlu0 %219, %v206
  %v221 = vpop.permute.xlu0 %220
  %224 = vset.pattern.permute.xlu0 0
  %225 = vperm.xlu0 %224, %v207
  %v226 = vpop.permute.xlu0 %225
  %229 = vset.pattern.permute.xlu0 0
  %230 = vperm.xlu0 %229, %v208
  %v231 = vpop.permute.xlu0 %230
  %234 = vset.pattern.permute.xlu0 0
  %235 = vperm.xlu0 %234, %v209
  %v236 = vpop.permute.xlu0 %235
  %239 = vset.pattern.permute.xlu0 0
  %240 = vperm.xlu0 %239, %v210
  %v241 = vpop.permute.xlu0 %240
  %244 = vset.pattern.permute.xlu0 0
  %245 = vperm.xlu0 %244, %v211
  %v246 = vpop.permute.xlu0 %245
  %249 = vset.pattern.permute.xlu0 0
  %250 = vperm.xlu0 %249, %v212
  %v251 = vpop.permute.xlu0 %250
  %vm253 = vcmask 130048
  %v255 = vsel %vm253, %v197, 0
  %v258 = vsel %vm253, %v198, 0
  %v261 = vsel %vm253, %v199, 0
  %v264 = vsel %vm253, %v200, 0
  %v267 = vsel %vm253, %v201, 0
  %v270 = vsel %vm253, %v202, 0
  %v273 = vsel %vm253, %v203, 0
  %v276 = vsel %vm253, %v204, 0
  %278 = vmatprep.subr.mxu0 0.0
  %279 = vmatpush1.msra.mxu0 0.0
  %280 = vmatprep.subr.mxu0 0.0
  %281 = vmatpush1.msra.mxu0 0.0
  %282 = vmatprep.subr.mxu0 0.0
  %283 = vmatpush1.msra.mxu0 0.0
  %284 = vmatprep.subr.mxu0 0.0
  %285 = vmatpush1.msra.mxu0 0.0
  %286 = vmatprep.subr.mxu0 0.0
  %287 = vmatpush1.msra.mxu0 0.0
  %288 = vmatprep.subr.mxu0 0.0
  %289 = vmatpush1.msra.mxu0 0.0
  %290 = vmatprep.subr.mxu0 0.0
  %291 = vmatpush1.msra.mxu0 0.0
  %292 = vmatprep.subr.mxu0 0.0
  %293 = vmatpush1.msra.mxu0 0.0
  %294 = vmatprep.subr.mxu0 0.0
  %295 = vmatpush1.msra.mxu0 0.0
  %296 = vmatprep.subr.mxu0 0.0
  %297 = vmatpush1.msra.mxu0 0.0
  %298 = vmatprep.subr.mxu0 0.0
  %299 = vmatpush1.msra.mxu0 0.0
  %300 = vmatprep.subr.mxu0 0.0
  %301 = vmatpush1.msra.mxu0 0.0
  %302 = vmatprep.subr.mxu0 0.0
  %303 = vmatpush1.msra.mxu0 0.0
  %304 = vmatprep.subr.mxu0 0.0
  %305 = vmatpush1.msra.mxu0 0.0
  %306 = vmatprep.subr.mxu0 0.0
  %307 = vmatpush1.msra.mxu0 %v196
  %308 = vmatprep.subr.mxu0 0.0
  %309 = vmatpush1.msra.mxu0 %v195
  %310 = vmatprep.subr.mxu0 0.0
  %311 = vmatpush2.msra.mxu0 0.0
  %312 = vmatprep.subr.mxu0 0.0
  %313 = vmatpush2.msra.mxu0 0.0
  %314 = vmatprep.subr.mxu0 0.0
  %315 = vmatpush2.msra.mxu0 0.0
  %316 = vmatprep.subr.mxu0 0.0
  %317 = vmatpush2.msra.mxu0 0.0
  %318 = vmatprep.subr.mxu0 0.0
  %319 = vmatpush2.msra.mxu0 0.0
  %320 = vmatprep.subr.mxu0 0.0
  %321 = vmatpush2.msra.mxu0 0.0
  %322 = vmatprep.subr.mxu0 0.0
  %323 = vmatpush2.msra.mxu0 0.0
  %324 = vmatprep.subr.mxu0 0.0
  %325 = vmatpush2.msra.mxu0 0.0
  %326 = vmatprep.subr.mxu0 0.0
  %327 = vmatpush2.msra.mxu0 0.0
  %328 = vmatprep.subr.mxu0 0.0
  %329 = vmatpush2.msra.mxu0 0.0
  %330 = vmatprep.subr.mxu0 0.0
  %331 = vmatpush2.msra.mxu0 0.0
  %332 = vmatprep.subr.mxu0 0.0
  %333 = vmatpush2.msra.mxu0 0.0
  %334 = vmatprep.subr.mxu0 0.0
  %335 = vmatpush2.msra.mxu0 0.0
  %336 = vmatprep.subr.mxu0 0.0
  %337 = vmatpush2.msra.mxu0 0.0
  %338 = vmatprep.subr.mxu0 0.0
  %339 = vmatpush2.msra.mxu0 0.0
  %340 = vmatprep.subr.mxu0 0.0
  %341 = vmatpush2.msra.mxu0 0.0
  %342 = vmatprep.mubr.f32.mxu0 0.0
  %343 = vmatmul.mubr.f32.gmra.mxu0 %v255
  %v344 = vpop.f32.mrf.mxu0
  %v345 = vadd.f32 %v216, %v344
  %v346 = vpop.f32.mrf.mxu0
  %347 = vmatprep.mubr.f32.mxu0 0.0
  %348 = vmatmul.mubr.f32.gmra.mxu0 %v258
  %v349 = vpop.f32.mrf.mxu0
  %v350 = vadd.f32 %v221, %v349
  %v351 = vpop.f32.mrf.mxu0
  %352 = vmatprep.mubr.f32.mxu0 0.0
  %353 = vmatmul.mubr.f32.gmra.mxu0 %v261
  %v354 = vpop.f32.mrf.mxu0
  %v355 = vadd.f32 %v226, %v354
  %v356 = vpop.f32.mrf.mxu0
  %357 = vmatprep.mubr.f32.mxu0 0.0
  %358 = vmatmul.mubr.f32.gmra.mxu0 %v264
  %v359 = vpop.f32.mrf.mxu0
  %v360 = vadd.f32 %v231, %v359
  %v361 = vpop.f32.mrf.mxu0
  %362 = vmatprep.mubr.f32.mxu0 0.0
  %363 = vmatmul.mubr.f32.gmra.mxu0 %v267
  %v364 = vpop.f32.mrf.mxu0
  %v365 = vadd.f32 %v236, %v364
  %v366 = vpop.f32.mrf.mxu0
  %367 = vmatprep.mubr.f32.mxu0 0.0
  %368 = vmatmul.mubr.f32.gmra.mxu0 %v270
  %v369 = vpop.f32.mrf.mxu0
  %v370 = vadd.f32 %v241, %v369
  %v371 = vpop.f32.mrf.mxu0
  %372 = vmatprep.mubr.f32.mxu0 0.0
  %373 = vmatmul.mubr.f32.gmra.mxu0 %v273
  %v374 = vpop.f32.mrf.mxu0
  %v375 = vadd.f32 %v246, %v374
  %v376 = vpop.f32.mrf.mxu0
  %377 = vmatprep.mubr.f32.mxu0 0.0
  %378 = vmatmul.mubr.f32.gmra.mxu0 %v276
  %v379 = vpop.f32.mrf.mxu0
  %v380 = vadd.f32 %v251, %v379
  %v381 = vpop.f32.mrf.mxu0
  %382 = vdwg.mxu0
  %383 = vmatprep.subr.mxu0 0.0
  %384 = vmatpush1.msra.mxu0 %v77
  %385 = vmatprep.subr.mxu0 0.0
  %386 = vmatpush1.msra.mxu0 %v76
  %387 = vmatprep.subr.mxu0 0.0
  %388 = vmatpush1.msra.mxu0 %v75
  %389 = vmatprep.subr.mxu0 0.0
  %390 = vmatpush1.msra.mxu0 %v74
  %391 = vmatprep.subr.mxu0 0.0
  %392 = vmatpush1.msra.mxu0 %v73
  %393 = vmatprep.subr.mxu0 0.0
  %394 = vmatpush1.msra.mxu0 %v72
  %395 = vmatprep.subr.mxu0 0.0
  %396 = vmatpush1.msra.mxu0 %v71
  %397 = vmatprep.subr.mxu0 0.0
  %398 = vmatpush1.msra.mxu0 %v70
  %399 = vmatprep.subr.mxu0 0.0
  %400 = vmatpush1.msra.mxu0 %v69
  %401 = vmatprep.subr.mxu0 0.0
  %402 = vmatpush1.msra.mxu0 %v68
  %403 = vmatprep.subr.mxu0 0.0
  %404 = vmatpush1.msra.mxu0 %v67
  %405 = vmatprep.subr.mxu0 0.0
  %406 = vmatpush1.msra.mxu0 %v66
  %407 = vmatprep.subr.mxu0 0.0
  %408 = vmatpush1.msra.mxu0 %v65
  %409 = vmatprep.subr.mxu0 0.0
  %410 = vmatpush1.msra.mxu0 %v64
  %411 = vmatprep.subr.mxu0 0.0
  %412 = vmatpush1.msra.mxu0 %v63
  %413 = vmatprep.subr.mxu0 0.0
  %414 = vmatpush1.msra.mxu0 %v62
  %415 = vmatprep.subr.mxu0 0.0
  %416 = vmatpush2.msra.mxu0 0.0
  %417 = vmatprep.subr.mxu0 0.0
  %418 = vmatpush2.msra.mxu0 0.0
  %419 = vmatprep.subr.mxu0 0.0
  %420 = vmatpush2.msra.mxu0 0.0
  %421 = vmatprep.subr.mxu0 0.0
  %422 = vmatpush2.msra.mxu0 0.0
  %423 = vmatprep.subr.mxu0 0.0
  %424 = vmatpush2.msra.mxu0 0.0
  %425 = vmatprep.subr.mxu0 0.0
  %426 = vmatpush2.msra.mxu0 0.0
  %427 = vmatprep.subr.mxu0 0.0
  %428 = vmatpush2.msra.mxu0 0.0
  %429 = vmatprep.subr.mxu0 0.0
  %430 = vmatpush2.msra.mxu0 0.0
  %431 = vmatprep.subr.mxu0 0.0
  %432 = vmatpush2.msra.mxu0 0.0
  %433 = vmatprep.subr.mxu0 0.0
  %434 = vmatpush2.msra.mxu0 0.0
  %435 = vmatprep.subr.mxu0 0.0
  %436 = vmatpush2.msra.mxu0 0.0
  %437 = vmatprep.subr.mxu0 0.0
  %438 = vmatpush2.msra.mxu0 0.0
  %439 = vmatprep.subr.mxu0 0.0
  %440 = vmatpush2.msra.mxu0 0.0
  %441 = vmatprep.subr.mxu0 0.0
  %442 = vmatpush2.msra.mxu0 0.0
  %443 = vmatprep.subr.mxu0 0.0
  %444 = vmatpush2.msra.mxu0 0.0
  %445 = vmatprep.subr.mxu0 0.0
  %446 = vmatpush2.msra.mxu0 0.0
  %447 = vmatprep.mubr.f32.mxu0 0.0
  %448 = vmatmul.mubr.f32.gmra.mxu0 %v91
  %v449 = vpop.f32.mrf.mxu0
  %v450 = vadd.f32 0.0, %v449
  %v451 = vpop.f32.mrf.mxu0
  %452 = vmatprep.mubr.f32.mxu0 0.0
  %453 = vmatmul.mubr.f32.gmra.mxu0 %v92
  %v454 = vpop.f32.mrf.mxu0
  %v455 = vadd.f32 0.0, %v454
  %v456 = vpop.f32.mrf.mxu0
  %457 = vmatprep.mubr.f32.mxu0 0.0
  %458 = vmatmul.mubr.f32.gmra.mxu0 %v93
  %v459 = vpop.f32.mrf.mxu0
  %v460 = vadd.f32 0.0, %v459
  %v461 = vpop.f32.mrf.mxu0
  %462 = vmatprep.mubr.f32.mxu0 0.0
  %463 = vmatmul.mubr.f32.gmra.mxu0 %v94
  %v464 = vpop.f32.mrf.mxu0
  %v465 = vadd.f32 0.0, %v464
  %v466 = vpop.f32.mrf.mxu0
  %467 = vmatprep.mubr.f32.mxu0 0.0
  %468 = vmatmul.mubr.f32.gmra.mxu0 %v95
  %v469 = vpop.f32.mrf.mxu0
  %v470 = vadd.f32 0.0, %v469
  %v471 = vpop.f32.mrf.mxu0
  %472 = vmatprep.mubr.f32.mxu0 0.0
  %473 = vmatmul.mubr.f32.gmra.mxu0 %v96
  %v474 = vpop.f32.mrf.mxu0
  %v475 = vadd.f32 0.0, %v474
  %v476 = vpop.f32.mrf.mxu0
  %477 = vmatprep.mubr.f32.mxu0 0.0
  %478 = vmatmul.mubr.f32.gmra.mxu0 %v97
  %v479 = vpop.f32.mrf.mxu0
  %v480 = vadd.f32 0.0, %v479
  %v481 = vpop.f32.mrf.mxu0
  %482 = vmatprep.mubr.f32.mxu0 0.0
  %483 = vmatmul.mubr.f32.gmra.mxu0 %v98
  %v484 = vpop.f32.mrf.mxu0
  %v485 = vadd.f32 0.0, %v484
  %v486 = vpop.f32.mrf.mxu0
  %487 = vdwg.mxu0
  %489 = vset.pattern.permute.xlu0 0
  %490 = vperm.xlu0 %489, %v81
  %v491 = vpop.permute.xlu0 %490
  %494 = vset.pattern.permute.xlu0 0
  %495 = vperm.xlu0 %494, %v82
  %v496 = vpop.permute.xlu0 %495
  %v499 = vsel %vm113, %v79, 0
  %v502 = vsel %vm113, %v80, 0
  %504 = vmatprep.subr.mxu0 0.0
  %505 = vmatpush1.msra.mxu0 0.0
  %506 = vmatprep.subr.mxu0 0.0
  %507 = vmatpush1.msra.mxu0 0.0
  %508 = vmatprep.subr.mxu0 0.0
  %509 = vmatpush1.msra.mxu0 0.0
  %510 = vmatprep.subr.mxu0 0.0
  %511 = vmatpush1.msra.mxu0 0.0
  %512 = vmatprep.subr.mxu0 0.0
  %513 = vmatpush1.msra.mxu0 0.0
  %514 = vmatprep.subr.mxu0 0.0
  %515 = vmatpush1.msra.mxu0 0.0
  %516 = vmatprep.subr.mxu0 0.0
  %517 = vmatpush1.msra.mxu0 0.0
  %518 = vmatprep.subr.mxu0 0.0
  %519 = vmatpush1.msra.mxu0 0.0
  %520 = vmatprep.subr.mxu0 0.0
  %521 = vmatpush1.msra.mxu0 %v485
  %522 = vmatprep.subr.mxu0 0.0
  %523 = vmatpush1.msra.mxu0 %v480
  %524 = vmatprep.subr.mxu0 0.0
  %525 = vmatpush1.msra.mxu0 %v475
  %526 = vmatprep.subr.mxu0 0.0
  %527 = vmatpush1.msra.mxu0 %v470
  %528 = vmatprep.subr.mxu0 0.0
  %529 = vmatpush1.msra.mxu0 %v465
  %530 = vmatprep.subr.mxu0 0.0
  %531 = vmatpush1.msra.mxu0 %v460
  %532 = vmatprep.subr.mxu0 0.0
  %533 = vmatpush1.msra.mxu0 %v455
  %534 = vmatprep.subr.mxu0 0.0
  %535 = vmatpush1.msra.mxu0 %v450
  %536 = vmatprep.subr.mxu0 0.0
  %537 = vmatpush2.msra.mxu0 0.0
  %538 = vmatprep.subr.mxu0 0.0
  %539 = vmatpush2.msra.mxu0 0.0
  %540 = vmatprep.subr.mxu0 0.0
  %541 = vmatpush2.msra.mxu0 0.0
  %542 = vmatprep.subr.mxu0 0.0
  %543 = vmatpush2.msra.mxu0 0.0
  %544 = vmatprep.subr.mxu0 0.0
  %545 = vmatpush2.msra.mxu0 0.0
  %546 = vmatprep.subr.mxu0 0.0
  %547 = vmatpush2.msra.mxu0 0.0
  %548 = vmatprep.subr.mxu0 0.0
  %549 = vmatpush2.msra.mxu0 0.0
  %550 = vmatprep.subr.mxu0 0.0
  %551 = vmatpush2.msra.mxu0 0.0
  %552 = vmatprep.subr.mxu0 0.0
  %553 = vmatpush2.msra.mxu0 0.0
  %554 = vmatprep.subr.mxu0 0.0
  %555 = vmatpush2.msra.mxu0 0.0
  %556 = vmatprep.subr.mxu0 0.0
  %557 = vmatpush2.msra.mxu0 0.0
  %558 = vmatprep.subr.mxu0 0.0
  %559 = vmatpush2.msra.mxu0 0.0
  %560 = vmatprep.subr.mxu0 0.0
  %561 = vmatpush2.msra.mxu0 0.0
  %562 = vmatprep.subr.mxu0 0.0
  %563 = vmatpush2.msra.mxu0 0.0
  %564 = vmatprep.subr.mxu0 0.0
  %565 = vmatpush2.msra.mxu0 0.0
  %566 = vmatprep.subr.mxu0 0.0
  %567 = vmatpush2.msra.mxu0 0.0
  %568 = vmatprep.mubr.f32.mxu0 0.0
  %569 = vmatmul.mubr.f32.gmra.mxu0 %v499
  %v570 = vpop.f32.mrf.mxu0
  %v571 = vadd.f32 %v491, %v570
  %v572 = vpop.f32.mrf.mxu0
  %573 = vmatprep.mubr.f32.mxu0 0.0
  %574 = vmatmul.mubr.f32.gmra.mxu0 %v502
  %v575 = vpop.f32.mrf.mxu0
  %v576 = vadd.f32 %v496, %v575
  %v577 = vpop.f32.mrf.mxu0
  %578 = vdwg.mxu0
  %v579 = vmax.f32 %v571, 0.0
  %v580 = vmax.f32 %v576, 0.0
  %v582 = vsel %vm253, %v83, 0
  %v585 = vsel %vm253, %v84, 0
  %v588 = vsel %vm253, %v85, 0
  %v591 = vsel %vm253, %v86, 0
  %v594 = vsel %vm253, %v87, 0
  %v597 = vsel %vm253, %v88, 0
  %v600 = vsel %vm253, %v89, 0
  %v603 = vsel %vm253, %v90, 0
  %605 = vmatprep.subr.mxu0 0.0
  %606 = vmatpush1.msra.mxu0 0.0
  %607 = vmatprep.subr.mxu0 0.0
  %608 = vmatpush1.msra.mxu0 0.0
  %609 = vmatprep.subr.mxu0 0.0
  %610 = vmatpush1.msra.mxu0 0.0
  %611 = vmatprep.subr.mxu0 0.0
  %612 = vmatpush1.msra.mxu0 0.0
  %613 = vmatprep.subr.mxu0 0.0
  %614 = vmatpush1.msra.mxu0 0.0
  %615 = vmatprep.subr.mxu0 0.0
  %616 = vmatpush1.msra.mxu0 0.0
  %617 = vmatprep.subr.mxu0 0.0
  %618 = vmatpush1.msra.mxu0 0.0
  %619 = vmatprep.subr.mxu0 0.0
  %620 = vmatpush1.msra.mxu0 0.0
  %621 = vmatprep.subr.mxu0 0.0
  %622 = vmatpush1.msra.mxu0 0.0
  %623 = vmatprep.subr.mxu0 0.0
  %624 = vmatpush1.msra.mxu0 0.0
  %625 = vmatprep.subr.mxu0 0.0
  %626 = vmatpush1.msra.mxu0 0.0
  %627 = vmatprep.subr.mxu0 0.0
  %628 = vmatpush1.msra.mxu0 0.0
  %629 = vmatprep.subr.mxu0 0.0
  %630 = vmatpush1.msra.mxu0 0.0
  %631 = vmatprep.subr.mxu0 0.0
  %632 = vmatpush1.msra.mxu0 0.0
  %633 = vmatprep.subr.mxu0 0.0
  %634 = vmatpush1.msra.mxu0 %v580
  %635 = vmatprep.subr.mxu0 0.0
  %636 = vmatpush1.msra.mxu0 %v579
  %637 = vmatprep.subr.mxu0 0.0
  %638 = vmatpush2.msra.mxu0 0.0
  %639 = vmatprep.subr.mxu0 0.0
  %640 = vmatpush2.msra.mxu0 0.0
  %641 = vmatprep.subr.mxu0 0.0
  %642 = vmatpush2.msra.mxu0 0.0
  %643 = vmatprep.subr.mxu0 0.0
  %644 = vmatpush2.msra.mxu0 0.0
  %645 = vmatprep.subr.mxu0 0.0
  %646 = vmatpush2.msra.mxu0 0.0
  %647 = vmatprep.subr.mxu0 0.0
  %648 = vmatpush2.msra.mxu0 0.0
  %649 = vmatprep.subr.mxu0 0.0
  %650 = vmatpush2.msra.mxu0 0.0
  %651 = vmatprep.subr.mxu0 0.0
  %652 = vmatpush2.msra.mxu0 0.0
  %653 = vmatprep.subr.mxu0 0.0
  %654 = vmatpush2.msra.mxu0 0.0
  %655 = vmatprep.subr.mxu0 0.0
  %656 = vmatpush2.msra.mxu0 0.0
  %657 = vmatprep.subr.mxu0 0.0
  %658 = vmatpush2.msra.mxu0 0.0
  %659 = vmatprep.subr.mxu0 0.0
  %660 = vmatpush2.msra.mxu0 0.0
  %661 = vmatprep.subr.mxu0 0.0
  %662 = vmatpush2.msra.mxu0 0.0
  %663 = vmatprep.subr.mxu0 0.0
  %664 = vmatpush2.msra.mxu0 0.0
  %665 = vmatprep.subr.mxu0 0.0
  %666 = vmatpush2.msra.mxu0 0.0
  %667 = vmatprep.subr.mxu0 0.0
  %668 = vmatpush2.msra.mxu0 0.0
  %669 = vmatprep.mubr.f32.mxu0 0.0
  %670 = vmatmul.mubr.f32.gmra.mxu0 %v582
  %v671 = vpop.f32.mrf.mxu0
  %v672 = vadd.f32 0.0, %v671
  %v673 = vpop.f32.mrf.mxu0
  %674 = vmatprep.mubr.f32.mxu0 0.0
  %675 = vmatmul.mubr.f32.gmra.mxu0 %v585
  %v676 = vpop.f32.mrf.mxu0
  %v677 = vadd.f32 0.0, %v676
  %v678 = vpop.f32.mrf.mxu0
  %679 = vmatprep.mubr.f32.mxu0 0.0
  %680 = vmatmul.mubr.f32.gmra.mxu0 %v588
  %v681 = vpop.f32.mrf.mxu0
  %v682 = vadd.f32 0.0, %v681
  %v683 = vpop.f32.mrf.mxu0
  %684 = vmatprep.mubr.f32.mxu0 0.0
  %685 = vmatmul.mubr.f32.gmra.mxu0 %v591
  %v686 = vpop.f32.mrf.mxu0
  %v687 = vadd.f32 0.0, %v686
  %v688 = vpop.f32.mrf.mxu0
  %689 = vmatprep.mubr.f32.mxu0 0.0
  %690 = vmatmul.mubr.f32.gmra.mxu0 %v594
  %v691 = vpop.f32.mrf.mxu0
  %v692 = vadd.f32 0.0, %v691
  %v693 = vpop.f32.mrf.mxu0
  %694 = vmatprep.mubr.f32.mxu0 0.0
  %695 = vmatmul.mubr.f32.gmra.mxu0 %v597
  %v696 = vpop.f32.mrf.mxu0
  %v697 = vadd.f32 0.0, %v696
  %v698 = vpop.f32.mrf.mxu0
  %699 = vmatprep.mubr.f32.mxu0 0.0
  %700 = vmatmul.mubr.f32.gmra.mxu0 %v600
  %v701 = vpop.f32.mrf.mxu0
  %v702 = vadd.f32 0.0, %v701
  %v703 = vpop.f32.mrf.mxu0
  %704 = vmatprep.mubr.f32.mxu0 0.0
  %705 = vmatmul.mubr.f32.gmra.mxu0 %v603
  %v706 = vpop.f32.mrf.mxu0
  %v707 = vadd.f32 0.0, %v706
  %v708 = vpop.f32.mrf.mxu0
  %709 = vdwg.mxu0
  %vm710 = vcmask 15360
  %v712 = vsel %vm710, %v672, 0
  %v715 = vsel %vm710, %v677, 0
  %v718 = vsel %vm710, %v682, 0
  %v721 = vsel %vm710, %v687, 0
  %v724 = vsel %vm710, %v692, 0
  %v727 = vsel %vm710, %v697, 0
  %v730 = vsel %vm710, %v702, 0
  %v733 = vsel %vm710, %v707, 0
  %vm735 = vcmask 1041408
  %v737 = vsel %vm735, %v78, 0
  %739 = vmatprep.subr.mxu0 0.0
  %740 = vmatpush1.msra.mxu0 0.0
  %741 = vmatprep.subr.mxu0 0.0
  %742 = vmatpush1.msra.mxu0 0.0
  %743 = vmatprep.subr.mxu0 0.0
  %744 = vmatpush1.msra.mxu0 0.0
  %745 = vmatprep.subr.mxu0 0.0
  %746 = vmatpush1.msra.mxu0 0.0
  %747 = vmatprep.subr.mxu0 0.0
  %748 = vmatpush1.msra.mxu0 0.0
  %749 = vmatprep.subr.mxu0 0.0
  %750 = vmatpush1.msra.mxu0 0.0
  %751 = vmatprep.subr.mxu0 0.0
  %752 = vmatpush1.msra.mxu0 0.0
  %753 = vmatprep.subr.mxu0 0.0
  %754 = vmatpush1.msra.mxu0 0.0
  %755 = vmatprep.subr.mxu0 0.0
  %756 = vmatpush1.msra.mxu0 0.0
  %757 = vmatprep.subr.mxu0 0.0
  %758 = vmatpush1.msra.mxu0 0.0
  %759 = vmatprep.subr.mxu0 0.0
  %760 = vmatpush1.msra.mxu0 0.0
  %761 = vmatprep.subr.mxu0 0.0
  %762 = vmatpush1.msra.mxu0 0.0
  %763 = vmatprep.subr.mxu0 0.0
  %764 = vmatpush1.msra.mxu0 0.0
  %765 = vmatprep.subr.mxu0 0.0
  %766 = vmatpush1.msra.mxu0 0.0
  %767 = vmatprep.subr.mxu0 0.0
  %768 = vmatpush1.msra.mxu0 0.0
  %769 = vmatprep.subr.mxu0 0.0
  %770 = vmatpush1.msra.mxu0 %v737
  %771 = vmatprep.subr.mxu0 0.0
  %772 = vmatpush2.msra.mxu0 0.0
  %773 = vmatprep.subr.mxu0 0.0
  %774 = vmatpush2.msra.mxu0 0.0
  %775 = vmatprep.subr.mxu0 0.0
  %776 = vmatpush2.msra.mxu0 0.0
  %777 = vmatprep.subr.mxu0 0.0
  %778 = vmatpush2.msra.mxu0 0.0
  %779 = vmatprep.subr.mxu0 0.0
  %780 = vmatpush2.msra.mxu0 0.0
  %781 = vmatprep.subr.mxu0 0.0
  %782 = vmatpush2.msra.mxu0 0.0
  %783 = vmatprep.subr.mxu0 0.0
  %784 = vmatpush2.msra.mxu0 0.0
  %785 = vmatprep.subr.mxu0 0.0
  %786 = vmatpush2.msra.mxu0 0.0
  %787 = vmatprep.subr.mxu0 0.0
  %788 = vmatpush2.msra.mxu0 0.0
  %789 = vmatprep.subr.mxu0 0.0
  %790 = vmatpush2.msra.mxu0 0.0
  %791 = vmatprep.subr.mxu0 0.0
  %792 = vmatpush2.msra.mxu0 0.0
  %793 = vmatprep.subr.mxu0 0.0
  %794 = vmatpush2.msra.mxu0 0.0
  %795 = vmatprep.subr.mxu0 0.0
  %796 = vmatpush2.msra.mxu0 0.0
  %797 = vmatprep.subr.mxu0 0.0
  %798 = vmatpush2.msra.mxu0 0.0
  %799 = vmatprep.subr.mxu0 0.0
  %800 = vmatpush2.msra.mxu0 0.0
  %801 = vmatprep.subr.mxu0 0.0
  %802 = vmatpush2.msra.mxu0 0.0
  %803 = vmatprep.mubr.f32.mxu0 0.0
  %804 = vmatmul.mubr.f32.gmra.mxu0 %v712
  %v805 = vpop.f32.mrf.mxu0
  %v806 = vadd.f32 0.0, %v805
  %v807 = vpop.f32.mrf.mxu0
  %808 = vmatprep.mubr.f32.mxu0 0.0
  %809 = vmatmul.mubr.f32.gmra.mxu0 %v715
  %v810 = vpop.f32.mrf.mxu0
  %v811 = vadd.f32 0.0, %v810
  %v812 = vpop.f32.mrf.mxu0
  %813 = vmatprep.mubr.f32.mxu0 0.0
  %814 = vmatmul.mubr.f32.gmra.mxu0 %v718
  %v815 = vpop.f32.mrf.mxu0
  %v816 = vadd.f32 0.0, %v815
  %v817 = vpop.f32.mrf.mxu0
  %818 = vmatprep.mubr.f32.mxu0 0.0
  %819 = vmatmul.mubr.f32.gmra.mxu0 %v721
  %v820 = vpop.f32.mrf.mxu0
  %v821 = vadd.f32 0.0, %v820
  %v822 = vpop.f32.mrf.mxu0
  %823 = vmatprep.mubr.f32.mxu0 0.0
  %824 = vmatmul.mubr.f32.gmra.mxu0 %v724
  %v825 = vpop.f32.mrf.mxu0
  %v826 = vadd.f32 0.0, %v825
  %v827 = vpop.f32.mrf.mxu0
  %828 = vmatprep.mubr.f32.mxu0 0.0
  %829 = vmatmul.mubr.f32.gmra.mxu0 %v727
  %v830 = vpop.f32.mrf.mxu0
  %v831 = vadd.f32 0.0, %v830
  %v832 = vpop.f32.mrf.mxu0
  %833 = vmatprep.mubr.f32.mxu0 0.0
  %834 = vmatmul.mubr.f32.gmra.mxu0 %v730
  %v835 = vpop.f32.mrf.mxu0
  %v836 = vadd.f32 0.0, %v835
  %v837 = vpop.f32.mrf.mxu0
  %838 = vmatprep.mubr.f32.mxu0 0.0
  %839 = vmatmul.mubr.f32.gmra.mxu0 %v733
  %v840 = vpop.f32.mrf.mxu0
  %v841 = vadd.f32 0.0, %v840
  %v842 = vpop.f32.mrf.mxu0
  %843 = vdwg.mxu0
  %v844 = vadd.f32 %v345, %v806
  %v845 = vadd.f32 %v350, %v811
  %v846 = vadd.f32 %v355, %v816
  %v847 = vadd.f32 %v360, %v821
  %v848 = vadd.f32 %v365, %v826
  %v849 = vadd.f32 %v370, %v831
  %v850 = vadd.f32 %v375, %v836
  %v851 = vadd.f32 %v380, %v841
  %v852 = vsub.f32 0.0, %v844
  %v853 = vsub.f32 0.0, %v845
  %v854 = vsub.f32 0.0, %v846
  %v855 = vsub.f32 0.0, %v847
  %v856 = vsub.f32 0.0, %v848
  %v857 = vsub.f32 0.0, %v849
  %v858 = vsub.f32 0.0, %v850
  %v859 = vsub.f32 0.0, %v851
  %v860 = vmul.f32 %v852, 1.442695
  %v861 = vpow.pop %v860
  %v862 = vmul.f32 %v853, 1.442695
  %v863 = vpow.pop %v862
  %v864 = vmul.f32 %v854, 1.442695
  %v865 = vpow.pop %v864
  %v866 = vmul.f32 %v855, 1.442695
  %v867 = vpow.pop %v866
  %v868 = vmul.f32 %v856, 1.442695
  %v869 = vpow.pop %v868
  %v870 = vmul.f32 %v857, 1.442695
  %v871 = vpow.pop %v870
  %v872 = vmul.f32 %v858, 1.442695
  %v873 = vpow.pop %v872
  %v874 = vmul.f32 %v859, 1.442695
  %v875 = vpow.pop %v874
  %v876 = vadd.f32 %v861, 1.0
  %v877 = vadd.f32 %v863, 1.0
  %v878 = vadd.f32 %v865, 1.0
  %v879 = vadd.f32 %v867, 1.0
  %v880 = vadd.f32 %v869, 1.0
  %v881 = vadd.f32 %v871, 1.0
  %v882 = vadd.f32 %v873, 1.0
  %v883 = vadd.f32 %v875, 1.0
  %v884 = vrcp.pop %v876
  %v885 = vmul.f32 1.0, %v884
  %v886 = vrcp.pop %v877
  %v887 = vmul.f32 1.0, %v886
  %v888 = vrcp.pop %v878
  %v889 = vmul.f32 1.0, %v888
  %v890 = vrcp.pop %v879
  %v891 = vmul.f32 1.0, %v890
  %v892 = vrcp.pop %v880
  %v893 = vmul.f32 1.0, %v892
  %v894 = vrcp.pop %v881
  %v895 = vmul.f32 1.0, %v894
  %v896 = vrcp.pop %v882
  %v897 = vmul.f32 1.0, %v896
  %v898 = vrcp.pop %v883
  %v899 = vmul.f32 1.0, %v898
  %v900 = vmul.f32 %v885, %v54
  %v901 = vmul.f32 %v887, %v55
  %v902 = vmul.f32 %v889, %v56
  %v903 = vmul.f32 %v891, %v57
  %v904 = vmul.f32 %v893, %v58
  %v905 = vmul.f32 %v895, %v59
  %v906 = vmul.f32 %v897, %v60
  %v907 = vmul.f32 %v899, %v61
  %v908 = vadd.f32 %v46, %v900
  %v909 = vadd.f32 %v47, %v901
  %v910 = vadd.f32 %v48, %v902
  %v911 = vadd.f32 %v49, %v903
  %v912 = vadd.f32 %v50, %v904
  %v913 = vadd.f32 %v51, %v905
  %v914 = vadd.f32 %v52, %v906
  %v915 = vadd.f32 %v53, %v907
  %s916 = scalar_lea.vmem %s4, 16
  %v917 = vld [vmem:[%s916] sm:$0xff]
  %v918 = vld [vmem:[%s916 + $0x8] sm:$0xff]
  %s919 = scalar_lea.vmem %s5, 16
  %v920 = vld [vmem:[%s919] sm:$0xff]
  %v921 = vld [vmem:[%s919 + $0x8] sm:$0xff]
  %923 = vset.pattern.permute.xlu0 0
  %924 = vperm.xlu0 %923, %v920
  %v925 = vpop.permute.xlu0 %924
  %928 = vset.pattern.permute.xlu0 0
  %929 = vperm.xlu0 %928, %v921
  %v930 = vpop.permute.xlu0 %929
  %v933 = vsel %vm113, %v917, 0
  %v936 = vsel %vm113, %v918, 0
  %938 = vmatprep.subr.mxu0 0.0
  %939 = vmatpush1.msra.mxu0 0.0
  %940 = vmatprep.subr.mxu0 0.0
  %941 = vmatpush1.msra.mxu0 0.0
  %942 = vmatprep.subr.mxu0 0.0
  %943 = vmatpush1.msra.mxu0 0.0
  %944 = vmatprep.subr.mxu0 0.0
  %945 = vmatpush1.msra.mxu0 0.0
  %946 = vmatprep.subr.mxu0 0.0
  %947 = vmatpush1.msra.mxu0 0.0
  %948 = vmatprep.subr.mxu0 0.0
  %949 = vmatpush1.msra.mxu0 0.0
  %950 = vmatprep.subr.mxu0 0.0
  %951 = vmatpush1.msra.mxu0 0.0
  %952 = vmatprep.subr.mxu0 0.0
  %953 = vmatpush1.msra.mxu0 0.0
  %954 = vmatprep.subr.mxu0 0.0
  %955 = vmatpush1.msra.mxu0 %v915
  %956 = vmatprep.subr.mxu0 0.0
  %957 = vmatpush1.msra.mxu0 %v914
  %958 = vmatprep.subr.mxu0 0.0
  %959 = vmatpush1.msra.mxu0 %v913
  %960 = vmatprep.subr.mxu0 0.0
  %961 = vmatpush1.msra.mxu0 %v912
  %962 = vmatprep.subr.mxu0 0.0
  %963 = vmatpush1.msra.mxu0 %v911
  %964 = vmatprep.subr.mxu0 0.0
  %965 = vmatpush1.msra.mxu0 %v910
  %966 = vmatprep.subr.mxu0 0.0
  %967 = vmatpush1.msra.mxu0 %v909
  %968 = vmatprep.subr.mxu0 0.0
  %969 = vmatpush1.msra.mxu0 %v908
  %970 = vmatprep.subr.mxu0 0.0
  %971 = vmatpush2.msra.mxu0 0.0
  %972 = vmatprep.subr.mxu0 0.0
  %973 = vmatpush2.msra.mxu0 0.0
  %974 = vmatprep.subr.mxu0 0.0
  %975 = vmatpush2.msra.mxu0 0.0
  %976 = vmatprep.subr.mxu0 0.0
  %977 = vmatpush2.msra.mxu0 0.0
  %978 = vmatprep.subr.mxu0 0.0
  %979 = vmatpush2.msra.mxu0 0.0
  %980 = vmatprep.subr.mxu0 0.0
  %981 = vmatpush2.msra.mxu0 0.0
  %982 = vmatprep.subr.mxu0 0.0
  %983 = vmatpush2.msra.mxu0 0.0
  %984 = vmatprep.subr.mxu0 0.0
  %985 = vmatpush2.msra.mxu0 0.0
  %986 = vmatprep.subr.mxu0 0.0
  %987 = vmatpush2.msra.mxu0 0.0
  %988 = vmatprep.subr.mxu0 0.0
  %989 = vmatpush2.msra.mxu0 0.0
  %990 = vmatprep.subr.mxu0 0.0
  %991 = vmatpush2.msra.mxu0 0.0
  %992 = vmatprep.subr.mxu0 0.0
  %993 = vmatpush2.msra.mxu0 0.0
  %994 = vmatprep.subr.mxu0 0.0
  %995 = vmatpush2.msra.mxu0 0.0
  %996 = vmatprep.subr.mxu0 0.0
  %997 = vmatpush2.msra.mxu0 0.0
  %998 = vmatprep.subr.mxu0 0.0
  %999 = vmatpush2.msra.mxu0 0.0
  %1000 = vmatprep.subr.mxu0 0.0
  %1001 = vmatpush2.msra.mxu0 0.0
  %1002 = vmatprep.mubr.f32.mxu0 0.0
  %1003 = vmatmul.mubr.f32.gmra.mxu0 %v933
  %v1004 = vpop.f32.mrf.mxu0
  %v1005 = vadd.f32 %v925, %v1004
  %v1006 = vpop.f32.mrf.mxu0
  %1007 = vmatprep.mubr.f32.mxu0 0.0
  %1008 = vmatmul.mubr.f32.gmra.mxu0 %v936
  %v1009 = vpop.f32.mrf.mxu0
  %v1010 = vadd.f32 %v930, %v1009
  %v1011 = vpop.f32.mrf.mxu0
  %1012 = vdwg.mxu0
  %v1013 = vmax.f32 %v1005, 0.0
  %v1014 = vmax.f32 %v1010, 0.0
  %s1015 = scalar_lea.vmem %s6, 64
  %v1016 = vld [vmem:[%s1015] sm:$0xff]
  %v1017 = vld [vmem:[%s1015 + $0x8] sm:$0xff]
  %v1018 = vld [vmem:[%s1015 + $0x10] sm:$0xff]
  %v1019 = vld [vmem:[%s1015 + $0x18] sm:$0xff]
  %v1020 = vld [vmem:[%s1015 + $0x20] sm:$0xff]
  %v1021 = vld [vmem:[%s1015 + $0x28] sm:$0xff]
  %v1022 = vld [vmem:[%s1015 + $0x30] sm:$0xff]
  %v1023 = vld [vmem:[%s1015 + $0x38] sm:$0xff]
  %s1024 = scalar_lea.vmem %s7, 64
  %v1025 = vld [vmem:[%s1024] sm:$0xff]
  %v1026 = vld [vmem:[%s1024 + $0x8] sm:$0xff]
  %v1027 = vld [vmem:[%s1024 + $0x10] sm:$0xff]
  %v1028 = vld [vmem:[%s1024 + $0x18] sm:$0xff]
  %v1029 = vld [vmem:[%s1024 + $0x20] sm:$0xff]
  %v1030 = vld [vmem:[%s1024 + $0x28] sm:$0xff]
  %v1031 = vld [vmem:[%s1024 + $0x30] sm:$0xff]
  %v1032 = vld [vmem:[%s1024 + $0x38] sm:$0xff]
  %1034 = vset.pattern.permute.xlu0 0
  %1035 = vperm.xlu0 %1034, %v1025
  %v1036 = vpop.permute.xlu0 %1035
  %1039 = vset.pattern.permute.xlu0 0
  %1040 = vperm.xlu0 %1039, %v1026
  %v1041 = vpop.permute.xlu0 %1040
  %1044 = vset.pattern.permute.xlu0 0
  %1045 = vperm.xlu0 %1044, %v1027
  %v1046 = vpop.permute.xlu0 %1045
  %1049 = vset.pattern.permute.xlu0 0
  %1050 = vperm.xlu0 %1049, %v1028
  %v1051 = vpop.permute.xlu0 %1050
  %1054 = vset.pattern.permute.xlu0 0
  %1055 = vperm.xlu0 %1054, %v1029
  %v1056 = vpop.permute.xlu0 %1055
  %1059 = vset.pattern.permute.xlu0 0
  %1060 = vperm.xlu0 %1059, %v1030
  %v1061 = vpop.permute.xlu0 %1060
  %1064 = vset.pattern.permute.xlu0 0
  %1065 = vperm.xlu0 %1064, %v1031
  %v1066 = vpop.permute.xlu0 %1065
  %1069 = vset.pattern.permute.xlu0 0
  %1070 = vperm.xlu0 %1069, %v1032
  %v1071 = vpop.permute.xlu0 %1070
  %v1074 = vsel %vm253, %v1016, 0
  %v1077 = vsel %vm253, %v1017, 0
  %v1080 = vsel %vm253, %v1018, 0
  %v1083 = vsel %vm253, %v1019, 0
  %v1086 = vsel %vm253, %v1020, 0
  %v1089 = vsel %vm253, %v1021, 0
  %v1092 = vsel %vm253, %v1022, 0
  %v1095 = vsel %vm253, %v1023, 0
  %1097 = vmatprep.subr.mxu0 0.0
  %1098 = vmatpush1.msra.mxu0 0.0
  %1099 = vmatprep.subr.mxu0 0.0
  %1100 = vmatpush1.msra.mxu0 0.0
  %1101 = vmatprep.subr.mxu0 0.0
  %1102 = vmatpush1.msra.mxu0 0.0
  %1103 = vmatprep.subr.mxu0 0.0
  %1104 = vmatpush1.msra.mxu0 0.0
  %1105 = vmatprep.subr.mxu0 0.0
  %1106 = vmatpush1.msra.mxu0 0.0
  %1107 = vmatprep.subr.mxu0 0.0
  %1108 = vmatpush1.msra.mxu0 0.0
  %1109 = vmatprep.subr.mxu0 0.0
  %1110 = vmatpush1.msra.mxu0 0.0
  %1111 = vmatprep.subr.mxu0 0.0
  %1112 = vmatpush1.msra.mxu0 0.0
  %1113 = vmatprep.subr.mxu0 0.0
  %1114 = vmatpush1.msra.mxu0 0.0
  %1115 = vmatprep.subr.mxu0 0.0
  %1116 = vmatpush1.msra.mxu0 0.0
  %1117 = vmatprep.subr.mxu0 0.0
  %1118 = vmatpush1.msra.mxu0 0.0
  %1119 = vmatprep.subr.mxu0 0.0
  %1120 = vmatpush1.msra.mxu0 0.0
  %1121 = vmatprep.subr.mxu0 0.0
  %1122 = vmatpush1.msra.mxu0 0.0
  %1123 = vmatprep.subr.mxu0 0.0
  %1124 = vmatpush1.msra.mxu0 0.0
  %1125 = vmatprep.subr.mxu0 0.0
  %1126 = vmatpush1.msra.mxu0 %v1014
  %1127 = vmatprep.subr.mxu0 0.0
  %1128 = vmatpush1.msra.mxu0 %v1013
  %1129 = vmatprep.subr.mxu0 0.0
  %1130 = vmatpush2.msra.mxu0 0.0
  %1131 = vmatprep.subr.mxu0 0.0
  %1132 = vmatpush2.msra.mxu0 0.0
  %1133 = vmatprep.subr.mxu0 0.0
  %1134 = vmatpush2.msra.mxu0 0.0
  %1135 = vmatprep.subr.mxu0 0.0
  %1136 = vmatpush2.msra.mxu0 0.0
  %1137 = vmatprep.subr.mxu0 0.0
  %1138 = vmatpush2.msra.mxu0 0.0
  %1139 = vmatprep.subr.mxu0 0.0
  %1140 = vmatpush2.msra.mxu0 0.0
  %1141 = vmatprep.subr.mxu0 0.0
  %1142 = vmatpush2.msra.mxu0 0.0
  %1143 = vmatprep.subr.mxu0 0.0
  %1144 = vmatpush2.msra.mxu0 0.0
  %1145 = vmatprep.subr.mxu0 0.0
  %1146 = vmatpush2.msra.mxu0 0.0
  %1147 = vmatprep.subr.mxu0 0.0
  %1148 = vmatpush2.msra.mxu0 0.0
  %1149 = vmatprep.subr.mxu0 0.0
  %1150 = vmatpush2.msra.mxu0 0.0
  %1151 = vmatprep.subr.mxu0 0.0
  %1152 = vmatpush2.msra.mxu0 0.0
  %1153 = vmatprep.subr.mxu0 0.0
  %1154 = vmatpush2.msra.mxu0 0.0
  %1155 = vmatprep.subr.mxu0 0.0
  %1156 = vmatpush2.msra.mxu0 0.0
  %1157 = vmatprep.subr.mxu0 0.0
  %1158 = vmatpush2.msra.mxu0 0.0
  %1159 = vmatprep.subr.mxu0 0.0
  %1160 = vmatpush2.msra.mxu0 0.0
  %1161 = vmatprep.mubr.f32.mxu0 0.0
  %1162 = vmatmul.mubr.f32.gmra.mxu0 %v1074
  %v1163 = vpop.f32.mrf.mxu0
  %v1164 = vadd.f32 %v1036, %v1163
  %v1165 = vpop.f32.mrf.mxu0
  %1166 = vmatprep.mubr.f32.mxu0 0.0
  %1167 = vmatmul.mubr.f32.gmra.mxu0 %v1077
  %v1168 = vpop.f32.mrf.mxu0
  %v1169 = vadd.f32 %v1041, %v1168
  %v1170 = vpop.f32.mrf.mxu0
  %1171 = vmatprep.mubr.f32.mxu0 0.0
  %1172 = vmatmul.mubr.f32.gmra.mxu0 %v1080
  %v1173 = vpop.f32.mrf.mxu0
  %v1174 = vadd.f32 %v1046, %v1173
  %v1175 = vpop.f32.mrf.mxu0
  %1176 = vmatprep.mubr.f32.mxu0 0.0
  %1177 = vmatmul.mubr.f32.gmra.mxu0 %v1083
  %v1178 = vpop.f32.mrf.mxu0
  %v1179 = vadd.f32 %v1051, %v1178
  %v1180 = vpop.f32.mrf.mxu0
  %1181 = vmatprep.mubr.f32.mxu0 0.0
  %1182 = vmatmul.mubr.f32.gmra.mxu0 %v1086
  %v1183 = vpop.f32.mrf.mxu0
  %v1184 = vadd.f32 %v1056, %v1183
  %v1185 = vpop.f32.mrf.mxu0
  %1186 = vmatprep.mubr.f32.mxu0 0.0
  %1187 = vmatmul.mubr.f32.gmra.mxu0 %v1089
  %v1188 = vpop.f32.mrf.mxu0
  %v1189 = vadd.f32 %v1061, %v1188
  %v1190 = vpop.f32.mrf.mxu0
  %1191 = vmatprep.mubr.f32.mxu0 0.0
  %1192 = vmatmul.mubr.f32.gmra.mxu0 %v1092
  %v1193 = vpop.f32.mrf.mxu0
  %v1194 = vadd.f32 %v1066, %v1193
  %v1195 = vpop.f32.mrf.mxu0
  %1196 = vmatprep.mubr.f32.mxu0 0.0
  %1197 = vmatmul.mubr.f32.gmra.mxu0 %v1095
  %v1198 = vpop.f32.mrf.mxu0
  %v1199 = vadd.f32 %v1071, %v1198
  %v1200 = vpop.f32.mrf.mxu0
  %1201 = vdwg.mxu0
  %1202 = vmatprep.subr.mxu0 0.0
  %1203 = vmatpush1.msra.mxu0 %v77
  %1204 = vmatprep.subr.mxu0 0.0
  %1205 = vmatpush1.msra.mxu0 %v76
  %1206 = vmatprep.subr.mxu0 0.0
  %1207 = vmatpush1.msra.mxu0 %v75
  %1208 = vmatprep.subr.mxu0 0.0
  %1209 = vmatpush1.msra.mxu0 %v74
  %1210 = vmatprep.subr.mxu0 0.0
  %1211 = vmatpush1.msra.mxu0 %v73
  %1212 = vmatprep.subr.mxu0 0.0
  %1213 = vmatpush1.msra.mxu0 %v72
  %1214 = vmatprep.subr.mxu0 0.0
  %1215 = vmatpush1.msra.mxu0 %v71
  %1216 = vmatprep.subr.mxu0 0.0
  %1217 = vmatpush1.msra.mxu0 %v70
  %1218 = vmatprep.subr.mxu0 0.0
  %1219 = vmatpush1.msra.mxu0 %v69
  %1220 = vmatprep.subr.mxu0 0.0
  %1221 = vmatpush1.msra.mxu0 %v68
  %1222 = vmatprep.subr.mxu0 0.0
  %1223 = vmatpush1.msra.mxu0 %v67
  %1224 = vmatprep.subr.mxu0 0.0
  %1225 = vmatpush1.msra.mxu0 %v66
  %1226 = vmatprep.subr.mxu0 0.0
  %1227 = vmatpush1.msra.mxu0 %v65
  %1228 = vmatprep.subr.mxu0 0.0
  %1229 = vmatpush1.msra.mxu0 %v64
  %1230 = vmatprep.subr.mxu0 0.0
  %1231 = vmatpush1.msra.mxu0 %v63
  %1232 = vmatprep.subr.mxu0 0.0
  %1233 = vmatpush1.msra.mxu0 %v62
  %1234 = vmatprep.subr.mxu0 0.0
  %1235 = vmatpush2.msra.mxu0 0.0
  %1236 = vmatprep.subr.mxu0 0.0
  %1237 = vmatpush2.msra.mxu0 0.0
  %1238 = vmatprep.subr.mxu0 0.0
  %1239 = vmatpush2.msra.mxu0 0.0
  %1240 = vmatprep.subr.mxu0 0.0
  %1241 = vmatpush2.msra.mxu0 0.0
  %1242 = vmatprep.subr.mxu0 0.0
  %1243 = vmatpush2.msra.mxu0 0.0
  %1244 = vmatprep.subr.mxu0 0.0
  %1245 = vmatpush2.msra.mxu0 0.0
  %1246 = vmatprep.subr.mxu0 0.0
  %1247 = vmatpush2.msra.mxu0 0.0
  %1248 = vmatprep.subr.mxu0 0.0
  %1249 = vmatpush2.msra.mxu0 0.0
  %1250 = vmatprep.subr.mxu0 0.0
  %1251 = vmatpush2.msra.mxu0 0.0
  %1252 = vmatprep.subr.mxu0 0.0
  %1253 = vmatpush2.msra.mxu0 0.0
  %1254 = vmatprep.subr.mxu0 0.0
  %1255 = vmatpush2.msra.mxu0 0.0
  %1256 = vmatprep.subr.mxu0 0.0
  %1257 = vmatpush2.msra.mxu0 0.0
  %1258 = vmatprep.subr.mxu0 0.0
  %1259 = vmatpush2.msra.mxu0 0.0
  %1260 = vmatprep.subr.mxu0 0.0
  %1261 = vmatpush2.msra.mxu0 0.0
  %1262 = vmatprep.subr.mxu0 0.0
  %1263 = vmatpush2.msra.mxu0 0.0
  %1264 = vmatprep.subr.mxu0 0.0
  %1265 = vmatpush2.msra.mxu0 0.0
  %1266 = vmatprep.mubr.f32.mxu0 0.0
  %1267 = vmatmul.mubr.f32.gmra.mxu0 %v908
  %v1268 = vpop.f32.mrf.mxu0
  %v1269 = vadd.f32 0.0, %v1268
  %v1270 = vpop.f32.mrf.mxu0
  %1271 = vmatprep.mubr.f32.mxu0 0.0
  %1272 = vmatmul.mubr.f32.gmra.mxu0 %v909
  %v1273 = vpop.f32.mrf.mxu0
  %v1274 = vadd.f32 0.0, %v1273
  %v1275 = vpop.f32.mrf.mxu0
  %1276 = vmatprep.mubr.f32.mxu0 0.0
  %1277 = vmatmul.mubr.f32.gmra.mxu0 %v910
  %v1278 = vpop.f32.mrf.mxu0
  %v1279 = vadd.f32 0.0, %v1278
  %v1280 = vpop.f32.mrf.mxu0
  %1281 = vmatprep.mubr.f32.mxu0 0.0
  %1282 = vmatmul.mubr.f32.gmra.mxu0 %v911
  %v1283 = vpop.f32.mrf.mxu0
  %v1284 = vadd.f32 0.0, %v1283
  %v1285 = vpop.f32.mrf.mxu0
  %1286 = vmatprep.mubr.f32.mxu0 0.0
  %1287 = vmatmul.mubr.f32.gmra.mxu0 %v912
  %v1288 = vpop.f32.mrf.mxu0
  %v1289 = vadd.f32 0.0, %v1288
  %v1290 = vpop.f32.mrf.mxu0
  %1291 = vmatprep.mubr.f32.mxu0 0.0
  %1292 = vmatmul.mubr.f32.gmra.mxu0 %v913
  %v1293 = vpop.f32.mrf.mxu0
  %v1294 = vadd.f32 0.0, %v1293
  %v1295 = vpop.f32.mrf.mxu0
  %1296 = vmatprep.mubr.f32.mxu0 0.0
  %1297 = vmatmul.mubr.f32.gmra.mxu0 %v914
  %v1298 = vpop.f32.mrf.mxu0
  %v1299 = vadd.f32 0.0, %v1298
  %v1300 = vpop.f32.mrf.mxu0
  %1301 = vmatprep.mubr.f32.mxu0 0.0
  %1302 = vmatmul.mubr.f32.gmra.mxu0 %v915
  %v1303 = vpop.f32.mrf.mxu0
  %v1304 = vadd.f32 0.0, %v1303
  %v1305 = vpop.f32.mrf.mxu0
  %1306 = vdwg.mxu0
  %1307 = vmatprep.subr.mxu0 0.0
  %1308 = vmatpush1.msra.mxu0 0.0
  %1309 = vmatprep.subr.mxu0 0.0
  %1310 = vmatpush1.msra.mxu0 0.0
  %1311 = vmatprep.subr.mxu0 0.0
  %1312 = vmatpush1.msra.mxu0 0.0
  %1313 = vmatprep.subr.mxu0 0.0
  %1314 = vmatpush1.msra.mxu0 0.0
  %1315 = vmatprep.subr.mxu0 0.0
  %1316 = vmatpush1.msra.mxu0 0.0
  %1317 = vmatprep.subr.mxu0 0.0
  %1318 = vmatpush1.msra.mxu0 0.0
  %1319 = vmatprep.subr.mxu0 0.0
  %1320 = vmatpush1.msra.mxu0 0.0
  %1321 = vmatprep.subr.mxu0 0.0
  %1322 = vmatpush1.msra.mxu0 0.0
  %1323 = vmatprep.subr.mxu0 0.0
  %1324 = vmatpush1.msra.mxu0 %v1304
  %1325 = vmatprep.subr.mxu0 0.0
  %1326 = vmatpush1.msra.mxu0 %v1299
  %1327 = vmatprep.subr.mxu0 0.0
  %1328 = vmatpush1.msra.mxu0 %v1294
  %1329 = vmatprep.subr.mxu0 0.0
  %1330 = vmatpush1.msra.mxu0 %v1289
  %1331 = vmatprep.subr.mxu0 0.0
  %1332 = vmatpush1.msra.mxu0 %v1284
  %1333 = vmatprep.subr.mxu0 0.0
  %1334 = vmatpush1.msra.mxu0 %v1279
  %1335 = vmatprep.subr.mxu0 0.0
  %1336 = vmatpush1.msra.mxu0 %v1274
  %1337 = vmatprep.subr.mxu0 0.0
  %1338 = vmatpush1.msra.mxu0 %v1269
  %1339 = vmatprep.subr.mxu0 0.0
  %1340 = vmatpush2.msra.mxu0 0.0
  %1341 = vmatprep.subr.mxu0 0.0
  %1342 = vmatpush2.msra.mxu0 0.0
  %1343 = vmatprep.subr.mxu0 0.0
  %1344 = vmatpush2.msra.mxu0 0.0
  %1345 = vmatprep.subr.mxu0 0.0
  %1346 = vmatpush2.msra.mxu0 0.0
  %1347 = vmatprep.subr.mxu0 0.0
  %1348 = vmatpush2.msra.mxu0 0.0
  %1349 = vmatprep.subr.mxu0 0.0
  %1350 = vmatpush2.msra.mxu0 0.0
  %1351 = vmatprep.subr.mxu0 0.0
  %1352 = vmatpush2.msra.mxu0 0.0
  %1353 = vmatprep.subr.mxu0 0.0
  %1354 = vmatpush2.msra.mxu0 0.0
  %1355 = vmatprep.subr.mxu0 0.0
  %1356 = vmatpush2.msra.mxu0 0.0
  %1357 = vmatprep.subr.mxu0 0.0
  %1358 = vmatpush2.msra.mxu0 0.0
  %1359 = vmatprep.subr.mxu0 0.0
  %1360 = vmatpush2.msra.mxu0 0.0
  %1361 = vmatprep.subr.mxu0 0.0
  %1362 = vmatpush2.msra.mxu0 0.0
  %1363 = vmatprep.subr.mxu0 0.0
  %1364 = vmatpush2.msra.mxu0 0.0
  %1365 = vmatprep.subr.mxu0 0.0
  %1366 = vmatpush2.msra.mxu0 0.0
  %1367 = vmatprep.subr.mxu0 0.0
  %1368 = vmatpush2.msra.mxu0 0.0
  %1369 = vmatprep.subr.mxu0 0.0
  %1370 = vmatpush2.msra.mxu0 0.0
  %1371 = vmatprep.mubr.f32.mxu0 0.0
  %1372 = vmatmul.mubr.f32.gmra.mxu0 %v499
  %v1373 = vpop.f32.mrf.mxu0
  %v1374 = vadd.f32 %v491, %v1373
  %v1375 = vpop.f32.mrf.mxu0
  %1376 = vmatprep.mubr.f32.mxu0 0.0
  %1377 = vmatmul.mubr.f32.gmra.mxu0 %v502
  %v1378 = vpop.f32.mrf.mxu0
  %v1379 = vadd.f32 %v496, %v1378
  %v1380 = vpop.f32.mrf.mxu0
  %1381 = vdwg.mxu0
  %v1382 = vmax.f32 %v1374, 0.0
  %v1383 = vmax.f32 %v1379, 0.0
  %1384 = vmatprep.subr.mxu0 0.0
  %1385 = vmatpush1.msra.mxu0 0.0
  %1386 = vmatprep.subr.mxu0 0.0
  %1387 = vmatpush1.msra.mxu0 0.0
  %1388 = vmatprep.subr.mxu0 0.0
  %1389 = vmatpush1.msra.mxu0 0.0
  %1390 = vmatprep.subr.mxu0 0.0
  %1391 = vmatpush1.msra.mxu0 0.0
  %1392 = vmatprep.subr.mxu0 0.0
  %1393 = vmatpush1.msra.mxu0 0.0
  %1394 = vmatprep.subr.mxu0 0.0
  %1395 = vmatpush1.msra.mxu0 0.0
  %1396 = vmatprep.subr.mxu0 0.0
  %1397 = vmatpush1.msra.mxu0 0.0
  %1398 = vmatprep.subr.mxu0 0.0
  %1399 = vmatpush1.msra.mxu0 0.0
  %1400 = vmatprep.subr.mxu0 0.0
  %1401 = vmatpush1.msra.mxu0 0.0
  %1402 = vmatprep.subr.mxu0 0.0
  %1403 = vmatpush1.msra.mxu0 0.0
  %1404 = vmatprep.subr.mxu0 0.0
  %1405 = vmatpush1.msra.mxu0 0.0
  %1406 = vmatprep.subr.mxu0 0.0
  %1407 = vmatpush1.msra.mxu0 0.0
  %1408 = vmatprep.subr.mxu0 0.0
  %1409 = vmatpush1.msra.mxu0 0.0
  %1410 = vmatprep.subr.mxu0 0.0
  %1411 = vmatpush1.msra.mxu0 0.0
  %1412 = vmatprep.subr.mxu0 0.0
  %1413 = vmatpush1.msra.mxu0 %v1383
  %1414 = vmatprep.subr.mxu0 0.0
  %1415 = vmatpush1.msra.mxu0 %v1382
  %1416 = vmatprep.subr.mxu0 0.0
  %1417 = vmatpush2.msra.mxu0 0.0
  %1418 = vmatprep.subr.mxu0 0.0
  %1419 = vmatpush2.msra.mxu0 0.0
  %1420 = vmatprep.subr.mxu0 0.0
  %1421 = vmatpush2.msra.mxu0 0.0
  %1422 = vmatprep.subr.mxu0 0.0
  %1423 = vmatpush2.msra.mxu0 0.0
  %1424 = vmatprep.subr.mxu0 0.0
  %1425 = vmatpush2.msra.mxu0 0.0
  %1426 = vmatprep.subr.mxu0 0.0
  %1427 = vmatpush2.msra.mxu0 0.0
  %1428 = vmatprep.subr.mxu0 0.0
  %1429 = vmatpush2.msra.mxu0 0.0
  %1430 = vmatprep.subr.mxu0 0.0
  %1431 = vmatpush2.msra.mxu0 0.0
  %1432 = vmatprep.subr.mxu0 0.0
  %1433 = vmatpush2.msra.mxu0 0.0
  %1434 = vmatprep.subr.mxu0 0.0
  %1435 = vmatpush2.msra.mxu0 0.0
  %1436 = vmatprep.subr.mxu0 0.0
  %1437 = vmatpush2.msra.mxu0 0.0
  %1438 = vmatprep.subr.mxu0 0.0
  %1439 = vmatpush2.msra.mxu0 0.0
  %1440 = vmatprep.subr.mxu0 0.0
  %1441 = vmatpush2.msra.mxu0 0.0
  %1442 = vmatprep.subr.mxu0 0.0
  %1443 = vmatpush2.msra.mxu0 0.0
  %1444 = vmatprep.subr.mxu0 0.0
  %1445 = vmatpush2.msra.mxu0 0.0
  %1446 = vmatprep.subr.mxu0 0.0
  %1447 = vmatpush2.msra.mxu0 0.0
  %1448 = vmatprep.mubr.f32.mxu0 0.0
  %1449 = vmatmul.mubr.f32.gmra.mxu0 %v582
  %v1450 = vpop.f32.mrf.mxu0
  %v1451 = vadd.f32 0.0, %v1450
  %v1452 = vpop.f32.mrf.mxu0
  %1453 = vmatprep.mubr.f32.mxu0 0.0
  %1454 = vmatmul.mubr.f32.gmra.mxu0 %v585
  %v1455 = vpop.f32.mrf.mxu0
  %v1456 = vadd.f32 0.0, %v1455
  %v1457 = vpop.f32.mrf.mxu0
  %1458 = vmatprep.mubr.f32.mxu0 0.0
  %1459 = vmatmul.mubr.f32.gmra.mxu0 %v588
  %v1460 = vpop.f32.mrf.mxu0
  %v1461 = vadd.f32 0.0, %v1460
  %v1462 = vpop.f32.mrf.mxu0
  %1463 = vmatprep.mubr.f32.mxu0 0.0
  %1464 = vmatmul.mubr.f32.gmra.mxu0 %v591
  %v1465 = vpop.f32.mrf.mxu0
  %v1466 = vadd.f32 0.0, %v1465
  %v1467 = vpop.f32.mrf.mxu0
  %1468 = vmatprep.mubr.f32.mxu0 0.0
  %1469 = vmatmul.mubr.f32.gmra.mxu0 %v594
  %v1470 = vpop.f32.mrf.mxu0
  %v1471 = vadd.f32 0.0, %v1470
  %v1472 = vpop.f32.mrf.mxu0
  %1473 = vmatprep.mubr.f32.mxu0 0.0
  %1474 = vmatmul.mubr.f32.gmra.mxu0 %v597
  %v1475 = vpop.f32.mrf.mxu0
  %v1476 = vadd.f32 0.0, %v1475
  %v1477 = vpop.f32.mrf.mxu0
  %1478 = vmatprep.mubr.f32.mxu0 0.0
  %1479 = vmatmul.mubr.f32.gmra.mxu0 %v600
  %v1480 = vpop.f32.mrf.mxu0
  %v1481 = vadd.f32 0.0, %v1480
  %v1482 = vpop.f32.mrf.mxu0
  %1483 = vmatprep.mubr.f32.mxu0 0.0
  %1484 = vmatmul.mubr.f32.gmra.mxu0 %v603
  %v1485 = vpop.f32.mrf.mxu0
  %v1486 = vadd.f32 0.0, %v1485
  %v1487 = vpop.f32.mrf.mxu0
  %1488 = vdwg.mxu0
  %v1490 = vsel %vm710, %v1451, 0
  %v1493 = vsel %vm710, %v1456, 0
  %v1496 = vsel %vm710, %v1461, 0
  %v1499 = vsel %vm710, %v1466, 0
  %v1502 = vsel %vm710, %v1471, 0
  %v1505 = vsel %vm710, %v1476, 0
  %v1508 = vsel %vm710, %v1481, 0
  %v1511 = vsel %vm710, %v1486, 0
  %1513 = vmatprep.subr.mxu0 0.0
  %1514 = vmatpush1.msra.mxu0 0.0
  %1515 = vmatprep.subr.mxu0 0.0
  %1516 = vmatpush1.msra.mxu0 0.0
  %1517 = vmatprep.subr.mxu0 0.0
  %1518 = vmatpush1.msra.mxu0 0.0
  %1519 = vmatprep.subr.mxu0 0.0
  %1520 = vmatpush1.msra.mxu0 0.0
  %1521 = vmatprep.subr.mxu0 0.0
  %1522 = vmatpush1.msra.mxu0 0.0
  %1523 = vmatprep.subr.mxu0 0.0
  %1524 = vmatpush1.msra.mxu0 0.0
  %1525 = vmatprep.subr.mxu0 0.0
  %1526 = vmatpush1.msra.mxu0 0.0
  %1527 = vmatprep.subr.mxu0 0.0
  %1528 = vmatpush1.msra.mxu0 0.0
  %1529 = vmatprep.subr.mxu0 0.0
  %1530 = vmatpush1.msra.mxu0 0.0
  %1531 = vmatprep.subr.mxu0 0.0
  %1532 = vmatpush1.msra.mxu0 0.0
  %1533 = vmatprep.subr.mxu0 0.0
  %1534 = vmatpush1.msra.mxu0 0.0
  %1535 = vmatprep.subr.mxu0 0.0
  %1536 = vmatpush1.msra.mxu0 0.0
  %1537 = vmatprep.subr.mxu0 0.0
  %1538 = vmatpush1.msra.mxu0 0.0
  %1539 = vmatprep.subr.mxu0 0.0
  %1540 = vmatpush1.msra.mxu0 0.0
  %1541 = vmatprep.subr.mxu0 0.0
  %1542 = vmatpush1.msra.mxu0 0.0
  %1543 = vmatprep.subr.mxu0 0.0
  %1544 = vmatpush1.msra.mxu0 %v737
  %1545 = vmatprep.subr.mxu0 0.0
  %1546 = vmatpush2.msra.mxu0 0.0
  %1547 = vmatprep.subr.mxu0 0.0
  %1548 = vmatpush2.msra.mxu0 0.0
  %1549 = vmatprep.subr.mxu0 0.0
  %1550 = vmatpush2.msra.mxu0 0.0
  %1551 = vmatprep.subr.mxu0 0.0
  %1552 = vmatpush2.msra.mxu0 0.0
  %1553 = vmatprep.subr.mxu0 0.0
  %1554 = vmatpush2.msra.mxu0 0.0
  %1555 = vmatprep.subr.mxu0 0.0
  %1556 = vmatpush2.msra.mxu0 0.0
  %1557 = vmatprep.subr.mxu0 0.0
  %1558 = vmatpush2.msra.mxu0 0.0
  %1559 = vmatprep.subr.mxu0 0.0
  %1560 = vmatpush2.msra.mxu0 0.0
  %1561 = vmatprep.subr.mxu0 0.0
  %1562 = vmatpush2.msra.mxu0 0.0
  %1563 = vmatprep.subr.mxu0 0.0
  %1564 = vmatpush2.msra.mxu0 0.0
  %1565 = vmatprep.subr.mxu0 0.0
  %1566 = vmatpush2.msra.mxu0 0.0
  %1567 = vmatprep.subr.mxu0 0.0
  %1568 = vmatpush2.msra.mxu0 0.0
  %1569 = vmatprep.subr.mxu0 0.0
  %1570 = vmatpush2.msra.mxu0 0.0
  %1571 = vmatprep.subr.mxu0 0.0
  %1572 = vmatpush2.msra.mxu0 0.0
  %1573 = vmatprep.subr.mxu0 0.0
  %1574 = vmatpush2.msra.mxu0 0.0
  %1575 = vmatprep.subr.mxu0 0.0
  %1576 = vmatpush2.msra.mxu0 0.0
  %1577 = vmatprep.mubr.f32.mxu0 0.0
  %1578 = vmatmul.mubr.f32.gmra.mxu0 %v1490
  %v1579 = vpop.f32.mrf.mxu0
  %v1580 = vadd.f32 0.0, %v1579
  %v1581 = vpop.f32.mrf.mxu0
  %1582 = vmatprep.mubr.f32.mxu0 0.0
  %1583 = vmatmul.mubr.f32.gmra.mxu0 %v1493
  %v1584 = vpop.f32.mrf.mxu0
  %v1585 = vadd.f32 0.0, %v1584
  %v1586 = vpop.f32.mrf.mxu0
  %1587 = vmatprep.mubr.f32.mxu0 0.0
  %1588 = vmatmul.mubr.f32.gmra.mxu0 %v1496
  %v1589 = vpop.f32.mrf.mxu0
  %v1590 = vadd.f32 0.0, %v1589
  %v1591 = vpop.f32.mrf.mxu0
  %1592 = vmatprep.mubr.f32.mxu0 0.0
  %1593 = vmatmul.mubr.f32.gmra.mxu0 %v1499
  %v1594 = vpop.f32.mrf.mxu0
  %v1595 = vadd.f32 0.0, %v1594
  %v1596 = vpop.f32.mrf.mxu0
  %1597 = vmatprep.mubr.f32.mxu0 0.0
  %1598 = vmatmul.mubr.f32.gmra.mxu0 %v1502
  %v1599 = vpop.f32.mrf.mxu0
  %v1600 = vadd.f32 0.0, %v1599
  %v1601 = vpop.f32.mrf.mxu0
  %1602 = vmatprep.mubr.f32.mxu0 0.0
  %1603 = vmatmul.mubr.f32.gmra.mxu0 %v1505
  %v1604 = vpop.f32.mrf.mxu0
  %v1605 = vadd.f32 0.0, %v1604
  %v1606 = vpop.f32.mrf.mxu0
  %1607 = vmatprep.mubr.f32.mxu0 0.0
  %1608 = vmatmul.mubr.f32.gmra.mxu0 %v1508
  %v1609 = vpop.f32.mrf.mxu0
  %v1610 = vadd.f32 0.0, %v1609
  %v1611 = vpop.f32.mrf.mxu0
  %1612 = vmatprep.mubr.f32.mxu0 0.0
  %1613 = vmatmul.mubr.f32.gmra.mxu0 %v1511
  %v1614 = vpop.f32.mrf.mxu0
  %v1615 = vadd.f32 0.0, %v1614
  %v1616 = vpop.f32.mrf.mxu0
  %1617 = vdwg.mxu0
  %v1618 = vadd.f32 %v1164, %v1580
  %v1619 = vadd.f32 %v1169, %v1585
  %v1620 = vadd.f32 %v1174, %v1590
  %v1621 = vadd.f32 %v1179, %v1595
  %v1622 = vadd.f32 %v1184, %v1600
  %v1623 = vadd.f32 %v1189, %v1605
  %v1624 = vadd.f32 %v1194, %v1610
  %v1625 = vadd.f32 %v1199, %v1615
  %v1626 = vsub.f32 0.0, %v1618
  %v1627 = vsub.f32 0.0, %v1619
  %v1628 = vsub.f32 0.0, %v1620
  %v1629 = vsub.f32 0.0, %v1621
  %v1630 = vsub.f32 0.0, %v1622
  %v1631 = vsub.f32 0.0, %v1623
  %v1632 = vsub.f32 0.0, %v1624
  %v1633 = vsub.f32 0.0, %v1625
  %v1634 = vmul.f32 %v1626, 1.442695
  %v1635 = vpow.pop %v1634
  %v1636 = vmul.f32 %v1627, 1.442695
  %v1637 = vpow.pop %v1636
  %v1638 = vmul.f32 %v1628, 1.442695
  %v1639 = vpow.pop %v1638
  %v1640 = vmul.f32 %v1629, 1.442695
  %v1641 = vpow.pop %v1640
  %v1642 = vmul.f32 %v1630, 1.442695
  %v1643 = vpow.pop %v1642
  %v1644 = vmul.f32 %v1631, 1.442695
  %v1645 = vpow.pop %v1644
  %v1646 = vmul.f32 %v1632, 1.442695
  %v1647 = vpow.pop %v1646
  %v1648 = vmul.f32 %v1633, 1.442695
  %v1649 = vpow.pop %v1648
  %v1650 = vadd.f32 %v1635, 1.0
  %v1651 = vadd.f32 %v1637, 1.0
  %v1652 = vadd.f32 %v1639, 1.0
  %v1653 = vadd.f32 %v1641, 1.0
  %v1654 = vadd.f32 %v1643, 1.0
  %v1655 = vadd.f32 %v1645, 1.0
  %v1656 = vadd.f32 %v1647, 1.0
  %v1657 = vadd.f32 %v1649, 1.0
  %v1658 = vrcp.pop %v1650
  %v1659 = vmul.f32 1.0, %v1658
  %v1660 = vrcp.pop %v1651
  %v1661 = vmul.f32 1.0, %v1660
  %v1662 = vrcp.pop %v1652
  %v1663 = vmul.f32 1.0, %v1662
  %v1664 = vrcp.pop %v1653
  %v1665 = vmul.f32 1.0, %v1664
  %v1666 = vrcp.pop %v1654
  %v1667 = vmul.f32 1.0, %v1666
  %v1668 = vrcp.pop %v1655
  %v1669 = vmul.f32 1.0, %v1668
  %v1670 = vrcp.pop %v1656
  %v1671 = vmul.f32 1.0, %v1670
  %v1672 = vrcp.pop %v1657
  %v1673 = vmul.f32 1.0, %v1672
  %v1674 = vmul.f32 %v1659, %v54
  %v1675 = vmul.f32 %v1661, %v55
  %v1676 = vmul.f32 %v1663, %v56
  %v1677 = vmul.f32 %v1665, %v57
  %v1678 = vmul.f32 %v1667, %v58
  %v1679 = vmul.f32 %v1669, %v59
  %v1680 = vmul.f32 %v1671, %v60
  %v1681 = vmul.f32 %v1673, %v61
  %v1682 = vadd.f32 %v46, %v1674
  %v1683 = vadd.f32 %v47, %v1675
  %v1684 = vadd.f32 %v48, %v1676
  %v1685 = vadd.f32 %v49, %v1677
  %v1686 = vadd.f32 %v50, %v1678
  %v1687 = vadd.f32 %v51, %v1679
  %v1688 = vadd.f32 %v52, %v1680
  %v1689 = vadd.f32 %v53, %v1681
  %1690 = vst [vmem:[%s11] sm:$0xff] %v1682
  %1691 = vst [vmem:[%s11 + $0x8] sm:$0xff] %v1683
  %1692 = vst [vmem:[%s11 + $0x10] sm:$0xff] %v1684
  %1693 = vst [vmem:[%s11 + $0x18] sm:$0xff] %v1685
  %1694 = vst [vmem:[%s11 + $0x20] sm:$0xff] %v1686
  %1695 = vst [vmem:[%s11 + $0x28] sm:$0xff] %v1687
  %1696 = vst [vmem:[%s11 + $0x30] sm:$0xff] %v1688
  %1697 = vst [vmem:[%s11 + $0x38] sm:$0xff] %v1689
  // Predicated region
  $region46: #{iaff_forward.1} parent=0 // pred_check
    _
  $region47: #{iaff_forward.1} parent=0 // pred_check_branch
    %1699 = sbr.rel (0) target = $region49
  $region48: #{iaff_forward.1} parent=0 // pred_region
    _
  $region49: #{iaff_forward.1} parent=0 // pred_fallthru
    _
  // Predicated region
  $region50: #{iaff_forward.1} parent=0 // pred_check
    _
  $region51: #{iaff_forward.1} parent=0 // pred_check_branch
    %1701 = sbr.rel (0) target = $region53
  $region52: #{iaff_forward.1} parent=0 // pred_region
    _
  $region53: #{iaff_forward.1} parent=0 // pred_fallthru
    _

</llo_original>
